<compile_context>
chip_gen: v5e
topology: v5e:2x2
jax: 0.10.0
libtpu: 0.0.40
codegen_flags: <defaults>
</compile_context>

<pallas_src>
import functools

import jax
import jax.numpy as jnp
from jax import lax
from jax.experimental import pallas as pl
from jax.experimental.pallas import tpu as pltpu

_VMEM_LIMIT_BYTES = 48 * 1024 * 1024  # > v5e 16MiB scoped default, < v7x 64MiB/TC.


def _round_up(x, m):
    return (x + m - 1) // m * m


def _itemsize(dtype):
    return 2 if dtype == jnp.bfloat16 else 4


def _bn_fold(gamma, beta, mean, var, eps=1e-5):
    scale = gamma / jnp.sqrt(var + eps)
    bias = beta - mean * scale
    return scale, bias


# --------------------------------------------------------------------- kernel 1: matmul
# Y = maybe_relu(X @ W + bias [+ residual]), tiled over (M, N, K) with f32 accumulator.
def _make_matmul_kernel(apply_relu, has_residual):
    def kernel(*refs):
        if has_residual:
            x_ref, w_ref, b_ref, r_ref, o_ref, acc_ref = refs
        else:
            x_ref, w_ref, b_ref, o_ref, acc_ref = refs
            r_ref = None
        kk = pl.program_id(2)

        @pl.when(kk == 0)
        def _():
            acc_ref[...] = jnp.zeros_like(acc_ref)

        acc_ref[...] += jnp.dot(x_ref[...], w_ref[...],
                                preferred_element_type=jnp.float32)

        @pl.when(kk == pl.num_programs(2) - 1)
        def _():
            out = acc_ref[...] + b_ref[...]
            if r_ref is not None:
                out = out + r_ref[...].astype(jnp.float32)
            if apply_relu:
                out = jnp.maximum(out, 0.0)
            o_ref[...] = out.astype(o_ref.dtype)

    return kernel


def fused_matmul_bn(x2d, w2d, bias, residual=None, relu=False,
                    out_dtype=jnp.float32):
    """x2d: (M, K) f32/bf16; w2d: (K, Np) f32 (BN scale folded, Np % 128 == 0);
    bias: (Np,) f32; residual: (M, Np) or None.  Returns (M, Np) out_dtype."""
    m, k = x2d.shape
    k2, ncp = w2d.shape
    assert k == k2 and ncp % 128 == 0

    tn = 256 if ncp % 256 == 0 else 128        # 256-aligned when possible (v6e/v7x MXU)
    if k <= 512:                               # a full-K block is always layout-legal
        tk, kp = k, k
    else:
        tk = 512                               # v7x-safe (64MiB/TC); fine on v5e/v6e
        kp = _round_up(k, tk)
    if m <= 512:
        tm = _round_up(m, 16)                  # bf16 LHS min tile is (16, 128)
        mp = tm
    else:
        tm = 512
        mp = _round_up(m, tm)

    xb = x2d
    if (mp, kp) != (m, k):
        xb = jnp.pad(xb, ((0, mp - m), (0, kp - k)))
    if xb.dtype != jnp.bfloat16:
        xb = xb.astype(jnp.bfloat16)           # bf16 MXU inputs, f32 accumulation
    wb = w2d if kp == k else jnp.pad(w2d, ((0, kp - k), (0, 0)))
    wb = wb.astype(jnp.bfloat16)
    bias2 = bias.reshape(1, ncp).astype(jnp.float32)

    args = [xb, wb, bias2]
    in_specs = [
        pl.BlockSpec((tm, tk), lambda i, j, kk: (i, kk)),
        pl.BlockSpec((tk, tn), lambda i, j, kk: (kk, j)),
        pl.BlockSpec((1, tn), lambda i, j, kk: (0, j)),
    ]
    res_bytes = 0
    if residual is not None:
        rb = residual.astype(jnp.bfloat16)     # bf16 residual read (half the traffic)
        if mp != m:
            rb = jnp.pad(rb, ((0, mp - m), (0, 0)))
        args.append(rb)
        in_specs.append(pl.BlockSpec((tm, tn), lambda i, j, kk: (i, j)))
        res_bytes = mp * ncp * 2

    cost = pl.CostEstimate(
        flops=2 * mp * kp * ncp,
        transcendentals=0,
        bytes_accessed=(2 * mp * kp + 2 * kp * ncp
                        + _itemsize(out_dtype) * mp * ncp + res_bytes))

    out = pl.pallas_call(
        _make_matmul_kernel(relu, residual is not None),
        out_shape=jax.ShapeDtypeStruct((mp, ncp), out_dtype),
        grid_spec=pltpu.PrefetchScalarGridSpec(
            num_scalar_prefetch=0,
            grid=(mp // tm, ncp // tn, kp // tk),
            in_specs=in_specs,
            out_specs=pl.BlockSpec((tm, tn), lambda i, j, kk: (i, j)),
            scratch_shapes=[pltpu.VMEM((tm, tn), jnp.float32)],
        ),
        compiler_params=pltpu.CompilerParams(
            dimension_semantics=("parallel", "parallel", "arbitrary"),
            vmem_limit_bytes=_VMEM_LIMIT_BYTES),
        cost_estimate=cost,
    )(*args)
    return out[:m] if mp != m else out


# ----------------------------------------------------------------- kernel 2: direct conv
# Direct convolution (no HBM im2col): grid = (batch, row_tile, Cout tile).
# The whole padded image of one batch element and all KH weight rows stay
# VMEM-resident; each step builds one (TR*Wo_pad, KW*Cin) im2col patch per KH row
# from contiguous slices and issues a single K = KW*Cin matmul.
def _make_conv_kernel(kh, kw, taps, tr, wo_pad, cin, apply_relu):
    """taps[ki][kj] = (row_offset, col_offset, channel_offset) into the input block."""

    def kernel(x_ref, w_ref, b_ref, o_ref):
        row0 = pl.multiple_of(pl.program_id(1) * tr, tr)
        acc = None
        for ki in range(kh):
            parts = []
            for kj in range(kw):
                a, c, c0 = taps[ki][kj]
                parts.append(
                    x_ref[pl.ds(row0 + a, tr), c:c + wo_pad, c0:c0 + cin])
            patch = parts[0] if kw == 1 else jnp.concatenate(parts, axis=-1)
            patch = patch.reshape(tr * wo_pad, kw * cin).astype(jnp.bfloat16)
            contrib = jnp.dot(patch, w_ref[ki], preferred_element_type=jnp.float32)
            acc = contrib if acc is None else acc + contrib
        out = acc + b_ref[...]
        if apply_relu:
            out = jnp.maximum(out, 0.0)
        o_ref[...] = out.astype(o_ref.dtype)

    return kernel


def _pick_row_tile(ho, wo_pad, m_cap=256):
    """Largest divisor tr of ho with tr*wo_pad <= m_cap and a 16-aligned M when the
    row axis is actually tiled; falls back to the whole image per step."""
    if ho * wo_pad <= m_cap:
        return ho
    for tr in range(ho - 1, 0, -1):
        if ho % tr:
            continue
        if tr * wo_pad <= m_cap and (tr * wo_pad) % 16 == 0:
            return tr
    return ho


def conv_bn_direct(x_nhwc, w_oihw, bn, stride, relu, out_dtype=jnp.bfloat16):
    """Direct KxK conv ('same' padding, stride 1 or 2) + folded BN (+ReLU).
    x_nhwc: (N,H,W,Cin) f32 (Cin padded to a multiple of 128);
    w_oihw: (Cout, Cin_w, KH, KW).  Returns (N,Ho,Wo,Cout_pad) out_dtype."""
    assert stride in (1, 2)
    n, h, w, cin = x_nhwc.shape
    cout, cin_w, kh, kw = w_oihw.shape
    assert stride == 1 or cin % 128 == 0
    pad = (kh - 1) // 2
    ho = (h + 2 * pad - kh) // stride + 1
    wo = (w + 2 * pad - kw) // stride + 1
    wo_pad = _round_up(wo, 8)          # 8-aligned M columns -> layout-preserving reshape
    cout_pad = _round_up(cout, 128)

    # Fold the BN scale into the weights; rows ordered (kj, ci) to match the patch.
    scale, bias = _bn_fold(*bn)
    wt = jnp.transpose(w_oihw, (2, 3, 1, 0)) * scale[None, None, None, :]  # (kh,kw,ci,co)
    if cin_w < cin:                    # input may carry zero-padded channels
        wt = jnp.pad(wt, ((0, 0), (0, 0), (0, cin - cin_w), (0, 0)))
    if cout_pad > cout:
        wt = jnp.pad(wt, ((0, 0), (0, 0), (0, 0), (0, cout_pad - cout)))
        bias = jnp.pad(bias, (0, cout_pad - cout))
    wt = wt.reshape(kh, kw * cin, cout_pad).astype(jnp.bfloat16)
    bias2 = bias.reshape(1, cout_pad).astype(jnp.float32)

    xp = x_nhwc
    if pad:
        xp = jnp.pad(xp, ((0, 0), (pad, pad), (pad, pad), (0, 0)))
    hp, wp = h + 2 * pad, w + 2 * pad

    if stride == 1:
        taps = [[(ki, kj, 0) for kj in range(kw)] for ki in range(kh)]
        max_c = max(t[1] for row in taps for t in row)
        win = max(wp, max_c + wo_pad)
        if win > wp:
            xp = jnp.pad(xp, ((0, 0), (0, 0), (0, win - wp), (0, 0)))
        x_in = xp
        hin, cin_tot = hp, cin
    else:
        # One-time 2x2 space-to-depth: plane (p, q) = xp[:, p::2, q::2, :], stacked
        # along channels.  A stride-2 tap (ki, kj) becomes a unit-stride read of
        # plane (ki%2, kj%2) at offsets (ki//2, kj//2) -> no strided reads in-kernel.
        hp2, wp2 = (hp + 1) // 2, (wp + 1) // 2
        taps = [[(ki // 2, kj // 2, (2 * (ki % 2) + (kj % 2)) * cin)
                 for kj in range(kw)] for ki in range(kh)]
        max_c = max(t[1] for row in taps for t in row)
        win = max(wp2, max_c + wo_pad)
        planes = []
        for p in range(2):
            for q in range(2):
                pln = xp[:, p::2, q::2, :]
                planes.append(jnp.pad(
                    pln, ((0, 0), (0, hp2 - pln.shape[1]),
                          (0, win - pln.shape[2]), (0, 0))))
        x_in = jnp.concatenate(planes, axis=-1)       # (n, hp2, win, 4*cin)
        hin, cin_tot = hp2, 4 * cin

    tr = _pick_row_tile(ho, wo_pad)
    rt = ho // tr
    tn = cout_pad if cout_pad <= 512 else (256 if cout_pad % 256 == 0 else 128)
    jn = cout_pad // tn

    cost = pl.CostEstimate(
        flops=2 * n * ho * wo_pad * kh * kw * cin * cout_pad,
        transcendentals=0,
        bytes_accessed=(n * hin * win * cin_tot * 4
                        + jn * kh * kw * cin * cout_pad * 2
                        + n * ho * wo_pad * cout_pad * _itemsize(out_dtype)))

    out = pl.pallas_call(
        _make_conv_kernel(kh, kw, taps, tr, wo_pad, cin, relu),
        out_shape=jax.ShapeDtypeStruct((n, ho * wo_pad, cout_pad), out_dtype),
        grid_spec=pltpu.PrefetchScalarGridSpec(
            num_scalar_prefetch=0,
            grid=(n, rt, jn),
            in_specs=[
                # whole (padded) image of one batch element; re-fetched only when
                # the batch index changes
                pl.BlockSpec((None, hin, win, cin_tot), lambda b, r, j: (b, 0, 0, 0)),
                # all KH weight rows resident; re-fetched only when the Cout tile changes
                pl.BlockSpec((kh, kw * cin, tn), lambda b, r, j: (0, 0, j)),
                pl.BlockSpec((1, tn), lambda b, r, j: (0, j)),
            ],
            out_specs=pl.BlockSpec((None, tr * wo_pad, tn), lambda b, r, j: (b, r, j)),
        ),
        compiler_params=pltpu.CompilerParams(
            dimension_semantics=("parallel", "parallel", "parallel"),
            vmem_limit_bytes=_VMEM_LIMIT_BYTES),
        cost_estimate=cost,
    )(x_in, wt, bias2)

    out = out.reshape(n, ho, wo_pad, cout_pad)
    if wo_pad != wo:
        out = out[:, :, :wo, :]
    return out


# ----------------------------------------------------------------------------- conv glue
def conv1x1_bn(x_nhwc, w_oihw, bn, relu=False, residual_2d=None,
               out_dtype=jnp.float32):
    """1x1 conv (stride 1) + folded BN (+residual)(+ReLU) via the tiled matmul kernel."""
    n, h, w, cin = x_nhwc.shape
    cout, cin_w = w_oihw.shape[0], w_oihw.shape[1]
    cout_pad = _round_up(cout, 128)

    scale, bias = _bn_fold(*bn)
    w2 = jnp.transpose(w_oihw[:, :, 0, 0], (1, 0)) * scale[None, :]   # (cin_w, cout)
    if cin_w < cin:                            # input may carry zero-padded channels
        w2 = jnp.pad(w2, ((0, cin - cin_w), (0, 0)))
    if cout_pad > cout:
        w2 = jnp.pad(w2, ((0, 0), (0, cout_pad - cout)))
        bias = jnp.pad(bias, (0, cout_pad - cout))

    x2d = x_nhwc.reshape(n * h * w, cin)
    y2d = fused_matmul_bn(x2d, w2, bias, residual=residual_2d, relu=relu,
                          out_dtype=out_dtype)
    return y2d.reshape(n, h, w, cout_pad)


# ----------------------------------------------------------------------------- Block
def init_block_params(key, inp, outp, midp1, midp2, stride):
    ks = jax.random.split(key, 16)

    def conv_w(k, cout, cin, kh, kw):
        return 0.1 * jax.random.normal(k, (cout, cin, kh, kw), jnp.float32)

    def bn_p(k, c):
        k1, k2, k3, k4 = jax.random.split(k, 4)
        gamma = 1.0 + 0.1 * jax.random.normal(k1, (c,), jnp.float32)
        beta = 0.1 * jax.random.normal(k2, (c,), jnp.float32)
        mean = 0.1 * jax.random.normal(k3, (c,), jnp.float32)
        var = 0.5 + jax.random.uniform(k4, (c,), jnp.float32)
        return (gamma, beta, mean, var)

    params = {
        "w1": conv_w(ks[0], midp1, inp, 1, 1), "bn1": bn_p(ks[1], midp1),
        "w2": conv_w(ks[2], midp2, midp1, 3, 3), "bn2": bn_p(ks[3], midp2),
        "w3": conv_w(ks[4], outp, midp2, 1, 1), "bn3": bn_p(ks[5], outp),
    }
    residual_connection = (stride == 1 and inp == outp)
    if not residual_connection:
        params["w_sc"] = conv_w(ks[6], outp, inp, 1, 1)
        params["bn_sc"] = bn_p(ks[7], outp)
    return params


def block_forward(params, x_nchw, inp, outp, stride):
    """Forward of Block.  Input/output are NCHW float32 (PyTorch convention)."""
    x = jnp.transpose(x_nchw, (0, 2, 3, 1))                      # -> NHWC
    n, h, w, _ = x.shape
    residual_connection = (stride == 1 and inp == outp)
    outp_pad = _round_up(outp, 128)

    # conv1 (1x1 s1) + BN + ReLU    -> channel-padded (lane-dense) intermediate
    h1 = conv1x1_bn(x, params["w1"], params["bn1"], relu=True,
                    out_dtype=jnp.float32)
    # conv2 (3x3, stride) + BN + ReLU, direct conv (no HBM im2col), bf16 output
    h2 = conv_bn_direct(h1, params["w2"], params["bn2"], stride, relu=True,
                        out_dtype=jnp.bfloat16)
    _, ho, wo, _ = h2.shape

    if residual_connection:
        res = jnp.pad(x.astype(jnp.bfloat16),
                      ((0, 0), (0, 0), (0, 0), (0, outp_pad - inp)))
        res2d = res.reshape(n * h * w, outp_pad)
    else:
        if stride > 1:
            # 1x1 strided shortcut: one wrapper-side spatial subsample, then the
            # fully pipelined matmul kernel (cheaper than per-tap strided reads).
            x_sc = x[:, ::stride, ::stride, :]
        else:
            x_sc = x
        sc = conv1x1_bn(x_sc, params["w_sc"], params["bn_sc"], relu=False,
                        out_dtype=jnp.bfloat16)
        res2d = sc.reshape(n * ho * wo, outp_pad)

    # conv3 (1x1) + BN + residual add + post ReLU fused in one kernel epilogue.
    out = conv1x1_bn(h2, params["w3"], params["bn3"], relu=True,
                     residual_2d=res2d, out_dtype=jnp.float32)
    out = out[..., :outp]                                         # drop channel padding
    return jnp.transpose(out, (0, 3, 1, 2))                       # -> NCHW


# ----------------------------------------------------------------------------- reference
def ref_forward(params, x_nchw, inp, outp, stride):
    dn = ("NCHW", "OIHW", "NCHW")

    def conv(x, w, s=1, p=0):
        return lax.conv_general_dilated(x, w, (s, s), [(p, p), (p, p)],
                                        dimension_numbers=dn)

    def bn(x, bnp):
        gamma, beta, mean, var = bnp
        s = gamma / jnp.sqrt(var + 1e-5)
        b = beta - mean * s
        return x * s[None, :, None, None] + b[None, :, None, None]

    h = jax.nn.relu(bn(conv(x_nchw, params["w1"]), params["bn1"]))
    h = jax.nn.relu(bn(conv(h, params["w2"], s=stride, p=1), params["bn2"]))
    h = bn(conv(h, params["w3"]), params["bn3"])
    if stride == 1 and inp == outp:
        res = x_nchw
    else:
        res = bn(conv(x_nchw, params["w_sc"], s=stride), params["bn_sc"])
    return jax.nn.relu(h + res)


# ----------------------------------------------------------------------------- main
if __name__ == "__main__":
    key = jax.random.PRNGKey(0)

    configs = [
        # (inp, outp, midp1, midp2, stride)
        (8, 16, 4, 4, 2),   # downsampling block with conv shortcut
        (8, 8, 4, 4, 1),    # identity-residual block
    ]

    N, H, W = 2, 8, 8
    for (inp, outp, midp1, midp2, stride) in configs:
        kp, kx, key = jax.random.split(key, 3)
        params = init_block_params(kp, inp, outp, midp1, midp2, stride)
        x = jax.random.normal(kx, (N, inp, H, W), jnp.float32)

        fwd = functools.partial(block_forward, inp=inp, outp=outp, stride=stride)
        out = jax.jit(fwd)(params, x)
        out = jax.block_until_ready(out)

        ref = ref_forward(params, x, inp, outp, stride)
        assert out.shape == ref.shape, (out.shape, ref.shape)
        # bf16 MXU inputs + bf16 intermediates with f32 accumulation -> loose tolerance.
        assert jnp.allclose(out, ref, rtol=3e-2, atol=3e-2), (
            float(jnp.max(jnp.abs(out - ref)))
        )

    print("KERNEL_OK")
</pallas_src>

<mosaic_0001>
module attributes {stable_mosaic.version = 11 : i64} {
  func.func @kernel(%arg0: i32, %arg1: i32, %arg2: i32, %arg3: memref<128x8xbf16, #tpu.memory_space<vmem>>, %arg4: memref<8x128xbf16, #tpu.memory_space<vmem>>, %arg5: memref<1x128xf32, #tpu.memory_space<vmem>>, %arg6: memref<128x128xf32, #tpu.memory_space<vmem>>, %arg7: memref<128x128xf32, #tpu.memory_space<vmem>>) attributes {dimension_semantics = [#tpu.dimension_semantics<parallel>, #tpu.dimension_semantics<parallel>, #tpu.dimension_semantics<arbitrary>], iteration_bounds = array<i64: 1, 1, 1>, scalar_prefetch = 0 : i64, scratch_operands = 1 : i64, tpu.core_type = #tpu.core_type<tc>, window_params = [{transform_indices = @transform_0, window_bounds = array<i64: 128, 8>}, {transform_indices = @transform_1, window_bounds = array<i64: 8, 128>}, {transform_indices = @transform_2, window_bounds = array<i64: 1, 128>}, {transform_indices = @transform_3, window_bounds = array<i64: 128, 128>}]} {
    %c0_i32 = arith.constant 0 : i32
    %0 = arith.cmpi eq, %arg2, %c0_i32 : i32
    %1 = arith.extui %0 : i1 to i32
    %c0_i32_0 = arith.constant 0 : i32
    %2 = arith.cmpi ne, %1, %c0_i32_0 : i32
    scf.if %2 {
      %cst_10 = arith.constant 0.000000e+00 : f32
      %12 = vector.broadcast %cst_10 : f32 to vector<128x128xf32>
      %c0_11 = arith.constant 0 : index
      %c0_12 = arith.constant 0 : index
      %13 = vector.load %arg7[%c0_11, %c0_12] : memref<128x128xf32, #tpu.memory_space<vmem>>, vector<128x128xf32>
      tpu.vector_store %arg7[%c0_11, %c0_12], %12 {strides = array<i32>} : memref<128x128xf32, #tpu.memory_space<vmem>>, vector<128x128xf32>,
    } else {
    }
    %c0 = arith.constant 0 : index
    %c0_1 = arith.constant 0 : index
    %3 = vector.load %arg7[%c0, %c0_1] : memref<128x128xf32, #tpu.memory_space<vmem>>, vector<128x128xf32>
    %c0_2 = arith.constant 0 : index
    %c0_3 = arith.constant 0 : index
    %4 = vector.load %arg3[%c0_2, %c0_3] : memref<128x8xbf16, #tpu.memory_space<vmem>>, vector<128x8xbf16>
    %c0_4 = arith.constant 0 : index
    %c0_5 = arith.constant 0 : index
    %5 = vector.load %arg4[%c0_4, %c0_5] : memref<8x128xbf16, #tpu.memory_space<vmem>>, vector<8x128xbf16>
    %cst = arith.constant dense<0.000000e+00> : vector<128x128xf32>
    %6 = tpu.matmul %4, %5, %cst {dimension_numbers = #tpu.dot_dimension_numbers<[1], [0], [0], [1], [0, 0, 1, 1], [], []>} : vector<128x8xbf16>, vector<8x128xbf16>, vector<128x128xf32> -> vector<128x128xf32>
    %7 = arith.addf %3, %6 : vector<128x128xf32>
    %c0_6 = arith.constant 0 : index
    %c0_7 = arith.constant 0 : index
    %8 = vector.load %arg7[%c0_6, %c0_7] : memref<128x128xf32, #tpu.memory_space<vmem>>, vector<128x128xf32>
    tpu.vector_store %arg7[%c0_6, %c0_7], %7 {strides = array<i32>} : memref<128x128xf32, #tpu.memory_space<vmem>>, vector<128x128xf32>,
    %c0_i32_8 = arith.constant 0 : i32
    %9 = arith.cmpi eq, %arg2, %c0_i32_8 : i32
    %10 = arith.extui %9 : i1 to i32
    %c0_i32_9 = arith.constant 0 : i32
    %11 = arith.cmpi ne, %10, %c0_i32_9 : i32
    scf.if %11 {
      %c0_10 = arith.constant 0 : index
      %c0_11 = arith.constant 0 : index
      %12 = vector.load %arg7[%c0_10, %c0_11] : memref<128x128xf32, #tpu.memory_space<vmem>>, vector<128x128xf32>
      %c0_12 = arith.constant 0 : index
      %c0_13 = arith.constant 0 : index
      %13 = vector.load %arg5[%c0_12, %c0_13] : memref<1x128xf32, #tpu.memory_space<vmem>>, vector<1x128xf32>
      %14 = vector.broadcast %13 : vector<1x128xf32> to vector<128x128xf32>
      %15 = arith.addf %12, %14 : vector<128x128xf32>
      %cst_14 = arith.constant 0.000000e+00 : f32
      %16 = vector.broadcast %cst_14 : f32 to vector<128x128xf32>
      %17 = arith.maximumf %15, %16 : vector<128x128xf32>
      %c0_15 = arith.constant 0 : index
      %c0_16 = arith.constant 0 : index
      %18 = vector.load %arg6[%c0_15, %c0_16] : memref<128x128xf32, #tpu.memory_space<vmem>>, vector<128x128xf32>
      tpu.vector_store %arg6[%c0_15, %c0_16], %17 {strides = array<i32>} : memref<128x128xf32, #tpu.memory_space<vmem>>, vector<128x128xf32>,
    } else {
    }
    return
  }
  func.func @transform_0(%arg0: i32, %arg1: i32, %arg2: i32) -> (i32, i32) {
    %c0_i32 = arith.constant 0 : i32
    return %arg0, %arg2 : i32, i32
  }
  func.func @transform_1(%arg0: i32, %arg1: i32, %arg2: i32) -> (i32, i32) {
    %c0_i32 = arith.constant 0 : i32
    return %arg2, %arg1 : i32, i32
  }
  func.func @transform_2(%arg0: i32, %arg1: i32, %arg2: i32) -> (i32, i32) {
    %c0_i32 = arith.constant 0 : i32
    %c0_i32_0 = arith.constant 0 : i32
    return %c0_i32, %arg1 : i32, i32
  }
  func.func @transform_3(%arg0: i32, %arg1: i32, %arg2: i32) -> (i32, i32) {
    %c0_i32 = arith.constant 0 : i32
    return %arg0, %arg1 : i32, i32
  }
}

module attributes {stable_mosaic.version = 11 : i64} {
  func.func @kernel(%arg0: i32, %arg1: i32, %arg2: i32, %arg3: memref<1x5x9x512xf32, #tpu.memory_space<vmem>>, %arg4: memref<3x384x128xbf16, #tpu.memory_space<vmem>>, %arg5: memref<1x128xf32, #tpu.memory_space<vmem>>, %arg6: memref<1x32x128xbf16, #tpu.memory_space<vmem>>) attributes {dimension_semantics = [#tpu.dimension_semantics<parallel>, #tpu.dimension_semantics<parallel>, #tpu.dimension_semantics<parallel>], iteration_bounds = array<i64: 2, 1, 1>, scalar_prefetch = 0 : i64, scratch_operands = 0 : i64, tpu.core_type = #tpu.core_type<tc>, window_params = [{transform_indices = @transform_0, window_bounds = array<i64: 1, 5, 9, 512>}, {transform_indices = @transform_1, window_bounds = array<i64: 3, 384, 128>}, {transform_indices = @transform_2, window_bounds = array<i64: 1, 128>}, {transform_indices = @transform_3, window_bounds = array<i64: 1, 32, 128>}]} {
    %c4_i32 = arith.constant 4 : i32
    %0 = arith.muli %arg1, %c4_i32 : i32
    %1 = tpu.assume_multiple %0, 4 : i32
    %c0_i32 = arith.constant 0 : i32
    %2 = arith.addi %1, %c0_i32 : i32
    %c0 = arith.constant 0 : index
    %3 = arith.index_cast %2 : i32 to index
    %c0_0 = arith.constant 0 : index
    %c0_1 = arith.constant 0 : index
    %4 = vector.load %arg3[%c0, %3, %c0_0, %c0_1] : memref<1x5x9x512xf32, #tpu.memory_space<vmem>>, vector<1x4x8x128xf32>
    %5 = vector.shape_cast %4 : vector<1x4x8x128xf32> to vector<4x8x128xf32>
    %c0_i32_2 = arith.constant 0 : i32
    %6 = arith.addi %1, %c0_i32_2 : i32
    %c0_3 = arith.constant 0 : index
    %7 = arith.index_cast %6 : i32 to index
    %c0_4 = arith.constant 0 : index
    %c128 = arith.constant 128 : index
    %8 = vector.load %arg3[%c0_3, %7, %c0_4, %c128] : memref<1x5x9x512xf32, #tpu.memory_space<vmem>>, vector<1x4x8x128xf32>
    %9 = vector.shape_cast %8 : vector<1x4x8x128xf32> to vector<4x8x128xf32>
    %c0_i32_5 = arith.constant 0 : i32
    %10 = arith.addi %1, %c0_i32_5 : i32
    %c0_6 = arith.constant 0 : index
    %11 = arith.index_cast %10 : i32 to index
    %c1 = arith.constant 1 : index
    %c0_7 = arith.constant 0 : index
    %12 = vector.load %arg3[%c0_6, %11, %c1, %c0_7] : memref<1x5x9x512xf32, #tpu.memory_space<vmem>>, vector<1x4x8x128xf32>
    %13 = vector.shape_cast %12 : vector<1x4x8x128xf32> to vector<4x8x128xf32>
    %14 = tpu.concatenate %5, %9, %13 in 2 : vector<4x8x128xf32>, vector<4x8x128xf32>, vector<4x8x128xf32> -> vector<4x8x384xf32>
    %15 = vector.shape_cast %14 : vector<4x8x384xf32> to vector<32x384xf32>
    %16 = arith.truncf %15 : vector<32x384xf32> to vector<32x384xbf16>
    %c0_8 = arith.constant 0 : index
    %c0_9 = arith.constant 0 : index
    %c0_10 = arith.constant 0 : index
    %17 = vector.load %arg4[%c0_8, %c0_9, %c0_10] : memref<3x384x128xbf16, #tpu.memory_space<vmem>>, vector<1x384x128xbf16>
    %18 = vector.shape_cast %17 : vector<1x384x128xbf16> to vector<384x128xbf16>
    %cst = arith.constant dense<0.000000e+00> : vector<32x128xf32>
    %19 = tpu.matmul %16, %18, %cst {dimension_numbers = #tpu.dot_dimension_numbers<[1], [0], [0], [1], [0, 0, 1, 1], [], []>} : vector<32x384xbf16>, vector<384x128xbf16>, vector<32x128xf32> -> vector<32x128xf32>
    %c0_i32_11 = arith.constant 0 : i32
    %20 = arith.addi %1, %c0_i32_11 : i32
    %c0_12 = arith.constant 0 : index
    %21 = arith.index_cast %20 : i32 to index
    %c0_13 = arith.constant 0 : index
    %c256 = arith.constant 256 : index
    %22 = vector.load %arg3[%c0_12, %21, %c0_13, %c256] : memref<1x5x9x512xf32, #tpu.memory_space<vmem>>, vector<1x4x8x128xf32>
    %23 = vector.shape_cast %22 : vector<1x4x8x128xf32> to vector<4x8x128xf32>
    %c0_i32_14 = arith.constant 0 : i32
    %24 = arith.addi %1, %c0_i32_14 : i32
    %c0_15 = arith.constant 0 : index
    %25 = arith.index_cast %24 : i32 to index
    %c0_16 = arith.constant 0 : index
    %c384 = arith.constant 384 : index
    %26 = vector.load %arg3[%c0_15, %25, %c0_16, %c384] : memref<1x5x9x512xf32, #tpu.memory_space<vmem>>, vector<1x4x8x128xf32>
    %27 = vector.shape_cast %26 : vector<1x4x8x128xf32> to vector<4x8x128xf32>
    %c0_i32_17 = arith.constant 0 : i32
    %28 = arith.addi %1, %c0_i32_17 : i32
    %c0_18 = arith.constant 0 : index
    %29 = arith.index_cast %28 : i32 to index
    %c1_19 = arith.constant 1 : index
    %c256_20 = arith.constant 256 : index
    %30 = vector.load %arg3[%c0_18, %29, %c1_19, %c256_20] : memref<1x5x9x512xf32, #tpu.memory_space<vmem>>, vector<1x4x8x128xf32>
    %31 = vector.shape_cast %30 : vector<1x4x8x128xf32> to vector<4x8x128xf32>
    %32 = tpu.concatenate %23, %27, %31 in 2 : vector<4x8x128xf32>, vector<4x8x128xf32>, vector<4x8x128xf32> -> vector<4x8x384xf32>
    %33 = vector.shape_cast %32 : vector<4x8x384xf32> to vector<32x384xf32>
    %34 = arith.truncf %33 : vector<32x384xf32> to vector<32x384xbf16>
    %c1_21 = arith.constant 1 : index
    %c0_22 = arith.constant 0 : index
    %c0_23 = arith.constant 0 : index
    %35 = vector.load %arg4[%c1_21, %c0_22, %c0_23] : memref<3x384x128xbf16, #tpu.memory_space<vmem>>, vector<1x384x128xbf16>
    %36 = vector.shape_cast %35 : vector<1x384x128xbf16> to vector<384x128xbf16>
    %cst_24 = arith.constant dense<0.000000e+00> : vector<32x128xf32>
    %37 = tpu.matmul %34, %36, %cst_24 {dimension_numbers = #tpu.dot_dimension_numbers<[1], [0], [0], [1], [0, 0, 1, 1], [], []>} : vector<32x384xbf16>, vector<384x128xbf16>, vector<32x128xf32> -> vector<32x128xf32>
    %38 = arith.addf %19, %37 : vector<32x128xf32>
    %c1_i32 = arith.constant 1 : i32
    %39 = arith.addi %1, %c1_i32 : i32
    %c0_25 = arith.constant 0 : index
    %40 = arith.index_cast %39 : i32 to index
    %c0_26 = arith.constant 0 : index
    %c0_27 = arith.constant 0 : index
    %41 = vector.load %arg3[%c0_25, %40, %c0_26, %c0_27] : memref<1x5x9x512xf32, #tpu.memory_space<vmem>>, vector<1x4x8x128xf32>
    %42 = vector.shape_cast %41 : vector<1x4x8x128xf32> to vector<4x8x128xf32>
    %c1_i32_28 = arith.constant 1 : i32
    %43 = arith.addi %1, %c1_i32_28 : i32
    %c0_29 = arith.constant 0 : index
    %44 = arith.index_cast %43 : i32 to index
    %c0_30 = arith.constant 0 : index
    %c128_31 = arith.constant 128 : index
    %45 = vector.load %arg3[%c0_29, %44, %c0_30, %c128_31] : memref<1x5x9x512xf32, #tpu.memory_space<vmem>>, vector<1x4x8x128xf32>
    %46 = vector.shape_cast %45 : vector<1x4x8x128xf32> to vector<4x8x128xf32>
    %c1_i32_32 = arith.constant 1 : i32
    %47 = arith.addi %1, %c1_i32_32 : i32
    %c0_33 = arith.constant 0 : index
    %48 = arith.index_cast %47 : i32 to index
    %c1_34 = arith.constant 1 : index
    %c0_35 = arith.constant 0 : index
    %49 = vector.load %arg3[%c0_33, %48, %c1_34, %c0_35] : memref<1x5x9x512xf32, #tpu.memory_space<vmem>>, vector<1x4x8x128xf32>
    %50 = vector.shape_cast %49 : vector<1x4x8x128xf32> to vector<4x8x128xf32>
    %51 = tpu.concatenate %42, %46, %50 in 2 : vector<4x8x128xf32>, vector<4x8x128xf32>, vector<4x8x128xf32> -> vector<4x8x384xf32>
    %52 = vector.shape_cast %51 : vector<4x8x384xf32> to vector<32x384xf32>
    %53 = arith.truncf %52 : vector<32x384xf32> to vector<32x384xbf16>
    %c2 = arith.constant 2 : index
    %c0_36 = arith.constant 0 : index
    %c0_37 = arith.constant 0 : index
    %54 = vector.load %arg4[%c2, %c0_36, %c0_37] : memref<3x384x128xbf16, #tpu.memory_space<vmem>>, vector<1x384x128xbf16>
    %55 = vector.shape_cast %54 : vector<1x384x128xbf16> to vector<384x128xbf16>
    %cst_38 = arith.constant dense<0.000000e+00> : vector<32x128xf32>
    %56 = tpu.matmul %53, %55, %cst_38 {dimension_numbers = #tpu.dot_dimension_numbers<[1], [0], [0], [1], [0, 0, 1, 1], [], []>} : vector<32x384xbf16>, vector<384x128xbf16>, vector<32x128xf32> -> vector<32x128xf32>
    %57 = arith.addf %38, %56 : vector<32x128xf32>
    %c0_39 = arith.constant 0 : index
    %c0_40 = arith.constant 0 : index
    %58 = vector.load %arg5[%c0_39, %c0_40] : memref<1x128xf32, #tpu.memory_space<vmem>>, vector<1x128xf32>
    %59 = vector.broadcast %58 : vector<1x128xf32> to vector<32x128xf32>
    %60 = arith.addf %57, %59 : vector<32x128xf32>
    %cst_41 = arith.constant 0.000000e+00 : f32
    %61 = vector.broadcast %cst_41 : f32 to vector<32x128xf32>
    %62 = arith.maximumf %60, %61 : vector<32x128xf32>
    %63 = arith.truncf %62 : vector<32x128xf32> to vector<32x128xbf16>
    %c0_42 = arith.constant 0 : index
    %c0_43 = arith.constant 0 : index
    %c0_44 = arith.constant 0 : index
    %64 = vector.load %arg6[%c0_42, %c0_43, %c0_44] : memref<1x32x128xbf16, #tpu.memory_space<vmem>>, vector<1x32x128xbf16>
    %65 = vector.shape_cast %64 : vector<1x32x128xbf16> to vector<32x128xbf16>
    %66 = vector.shape_cast %63 : vector<32x128xbf16> to vector<1x32x128xbf16>
    tpu.vector_store %arg6[%c0_42, %c0_43, %c0_44], %66 {strides = array<i32>} : memref<1x32x128xbf16, #tpu.memory_space<vmem>>, vector<1x32x128xbf16>,
    return
  }
  func.func @transform_0(%arg0: i32, %arg1: i32, %arg2: i32) -> (i32, i32, i32, i32) {
    %c0_i32 = arith.constant 0 : i32
    %c0_i32_0 = arith.constant 0 : i32
    %c0_i32_1 = arith.constant 0 : i32
    %c0_i32_2 = arith.constant 0 : i32
    return %arg0, %c0_i32, %c0_i32_0, %c0_i32_1 : i32, i32, i32, i32
  }
  func.func @transform_1(%arg0: i32, %arg1: i32, %arg2: i32) -> (i32, i32, i32) {
    %c0_i32 = arith.constant 0 : i32
    %c0_i32_0 = arith.constant 0 : i32
    %c0_i32_1 = arith.constant 0 : i32
    return %c0_i32, %c0_i32_0, %arg2 : i32, i32, i32
  }
  func.func @transform_2(%arg0: i32, %arg1: i32, %arg2: i32) -> (i32, i32) {
    %c0_i32 = arith.constant 0 : i32
    %c0_i32_0 = arith.constant 0 : i32
    return %c0_i32, %arg2 : i32, i32
  }
  func.func @transform_3(%arg0: i32, %arg1: i32, %arg2: i32) -> (i32, i32, i32) {
    %c0_i32 = arith.constant 0 : i32
    return %arg0, %arg1, %arg2 : i32, i32, i32
  }
}

module attributes {stable_mosaic.version = 11 : i64} {
  func.func @kernel(%arg0: i32, %arg1: i32, %arg2: i32, %arg3: memref<32x8xbf16, #tpu.memory_space<vmem>>, %arg4: memref<8x128xbf16, #tpu.memory_space<vmem>>, %arg5: memref<1x128xf32, #tpu.memory_space<vmem>>, %arg6: memref<32x128xbf16, #tpu.memory_space<vmem>>, %arg7: memref<32x128xf32, #tpu.memory_space<vmem>>) attributes {dimension_semantics = [#tpu.dimension_semantics<parallel>, #tpu.dimension_semantics<parallel>, #tpu.dimension_semantics<arbitrary>], iteration_bounds = array<i64: 1, 1, 1>, scalar_prefetch = 0 : i64, scratch_operands = 1 : i64, tpu.core_type = #tpu.core_type<tc>, window_params = [{transform_indices = @transform_0, window_bounds = array<i64: 32, 8>}, {transform_indices = @transform_1, window_bounds = array<i64: 8, 128>}, {transform_indices = @transform_2, window_bounds = array<i64: 1, 128>}, {transform_indices = @transform_3, window_bounds = array<i64: 32, 128>}]} {
    %c0_i32 = arith.constant 0 : i32
    %0 = arith.cmpi eq, %arg2, %c0_i32 : i32
    %1 = arith.extui %0 : i1 to i32
    %c0_i32_0 = arith.constant 0 : i32
    %2 = arith.cmpi ne, %1, %c0_i32_0 : i32
    scf.if %2 {
      %cst_10 = arith.constant 0.000000e+00 : f32
      %12 = vector.broadcast %cst_10 : f32 to vector<32x128xf32>
      %c0_11 = arith.constant 0 : index
      %c0_12 = arith.constant 0 : index
      %13 = vector.load %arg7[%c0_11, %c0_12] : memref<32x128xf32, #tpu.memory_space<vmem>>, vector<32x128xf32>
      tpu.vector_store %arg7[%c0_11, %c0_12], %12 {strides = array<i32>} : memref<32x128xf32, #tpu.memory_space<vmem>>, vector<32x128xf32>,
    } else {
    }
    %c0 = arith.constant 0 : index
    %c0_1 = arith.constant 0 : index
    %3 = vector.load %arg7[%c0, %c0_1] : memref<32x128xf32, #tpu.memory_space<vmem>>, vector<32x128xf32>
    %c0_2 = arith.constant 0 : index
    %c0_3 = arith.constant 0 : index
    %4 = vector.load %arg3[%c0_2, %c0_3] : memref<32x8xbf16, #tpu.memory_space<vmem>>, vector<32x8xbf16>
    %c0_4 = arith.constant 0 : index
    %c0_5 = arith.constant 0 : index
    %5 = vector.load %arg4[%c0_4, %c0_5] : memref<8x128xbf16, #tpu.memory_space<vmem>>, vector<8x128xbf16>
    %cst = arith.constant dense<0.000000e+00> : vector<32x128xf32>
    %6 = tpu.matmul %4, %5, %cst {dimension_numbers = #tpu.dot_dimension_numbers<[1], [0], [0], [1], [0, 0, 1, 1], [], []>} : vector<32x8xbf16>, vector<8x128xbf16>, vector<32x128xf32> -> vector<32x128xf32>
    %7 = arith.addf %3, %6 : vector<32x128xf32>
    %c0_6 = arith.constant 0 : index
    %c0_7 = arith.constant 0 : index
    %8 = vector.load %arg7[%c0_6, %c0_7] : memref<32x128xf32, #tpu.memory_space<vmem>>, vector<32x128xf32>
    tpu.vector_store %arg7[%c0_6, %c0_7], %7 {strides = array<i32>} : memref<32x128xf32, #tpu.memory_space<vmem>>, vector<32x128xf32>,
    %c0_i32_8 = arith.constant 0 : i32
    %9 = arith.cmpi eq, %arg2, %c0_i32_8 : i32
    %10 = arith.extui %9 : i1 to i32
    %c0_i32_9 = arith.constant 0 : i32
    %11 = arith.cmpi ne, %10, %c0_i32_9 : i32
    scf.if %11 {
      %c0_10 = arith.constant 0 : index
      %c0_11 = arith.constant 0 : index
      %12 = vector.load %arg7[%c0_10, %c0_11] : memref<32x128xf32, #tpu.memory_space<vmem>>, vector<32x128xf32>
      %c0_12 = arith.constant 0 : index
      %c0_13 = arith.constant 0 : index
      %13 = vector.load %arg5[%c0_12, %c0_13] : memref<1x128xf32, #tpu.memory_space<vmem>>, vector<1x128xf32>
      %14 = vector.broadcast %13 : vector<1x128xf32> to vector<32x128xf32>
      %15 = arith.addf %12, %14 : vector<32x128xf32>
      %16 = arith.truncf %15 : vector<32x128xf32> to vector<32x128xbf16>
      %c0_14 = arith.constant 0 : index
      %c0_15 = arith.constant 0 : index
      %17 = vector.load %arg6[%c0_14, %c0_15] : memref<32x128xbf16, #tpu.memory_space<vmem>>, vector<32x128xbf16>
      tpu.vector_store %arg6[%c0_14, %c0_15], %16 {strides = array<i32>} : memref<32x128xbf16, #tpu.memory_space<vmem>>, vector<32x128xbf16>,
    } else {
    }
    return
  }
  func.func @transform_0(%arg0: i32, %arg1: i32, %arg2: i32) -> (i32, i32) {
    %c0_i32 = arith.constant 0 : i32
    return %arg0, %arg2 : i32, i32
  }
  func.func @transform_1(%arg0: i32, %arg1: i32, %arg2: i32) -> (i32, i32) {
    %c0_i32 = arith.constant 0 : i32
    return %arg2, %arg1 : i32, i32
  }
  func.func @transform_2(%arg0: i32, %arg1: i32, %arg2: i32) -> (i32, i32) {
    %c0_i32 = arith.constant 0 : i32
    %c0_i32_0 = arith.constant 0 : i32
    return %c0_i32, %arg1 : i32, i32
  }
  func.func @transform_3(%arg0: i32, %arg1: i32, %arg2: i32) -> (i32, i32) {
    %c0_i32 = arith.constant 0 : i32
    return %arg0, %arg1 : i32, i32
  }
}

module attributes {stable_mosaic.version = 11 : i64} {
  func.func @kernel(%arg0: i32, %arg1: i32, %arg2: i32, %arg3: memref<32x128xbf16, #tpu.memory_space<vmem>>, %arg4: memref<128x128xbf16, #tpu.memory_space<vmem>>, %arg5: memref<1x128xf32, #tpu.memory_space<vmem>>, %arg6: memref<32x128xbf16, #tpu.memory_space<vmem>>, %arg7: memref<32x128xf32, #tpu.memory_space<vmem>>, %arg8: memref<32x128xf32, #tpu.memory_space<vmem>>) attributes {dimension_semantics = [#tpu.dimension_semantics<parallel>, #tpu.dimension_semantics<parallel>, #tpu.dimension_semantics<arbitrary>], iteration_bounds = array<i64: 1, 1, 1>, scalar_prefetch = 0 : i64, scratch_operands = 1 : i64, tpu.core_type = #tpu.core_type<tc>, window_params = [{transform_indices = @transform_0, window_bounds = array<i64: 32, 128>}, {transform_indices = @transform_1, window_bounds = array<i64: 128, 128>}, {transform_indices = @transform_2, window_bounds = array<i64: 1, 128>}, {transform_indices = @transform_3, window_bounds = array<i64: 32, 128>}, {transform_indices = @transform_4, window_bounds = array<i64: 32, 128>}]} {
    %c0_i32 = arith.constant 0 : i32
    %0 = arith.cmpi eq, %arg2, %c0_i32 : i32
    %1 = arith.extui %0 : i1 to i32
    %c0_i32_0 = arith.constant 0 : i32
    %2 = arith.cmpi ne, %1, %c0_i32_0 : i32
    scf.if %2 {
      %cst_10 = arith.constant 0.000000e+00 : f32
      %12 = vector.broadcast %cst_10 : f32 to vector<32x128xf32>
      %c0_11 = arith.constant 0 : index
      %c0_12 = arith.constant 0 : index
      %13 = vector.load %arg8[%c0_11, %c0_12] : memref<32x128xf32, #tpu.memory_space<vmem>>, vector<32x128xf32>
      tpu.vector_store %arg8[%c0_11, %c0_12], %12 {strides = array<i32>} : memref<32x128xf32, #tpu.memory_space<vmem>>, vector<32x128xf32>,
    } else {
    }
    %c0 = arith.constant 0 : index
    %c0_1 = arith.constant 0 : index
    %3 = vector.load %arg8[%c0, %c0_1] : memref<32x128xf32, #tpu.memory_space<vmem>>, vector<32x128xf32>
    %c0_2 = arith.constant 0 : index
    %c0_3 = arith.constant 0 : index
    %4 = vector.load %arg3[%c0_2, %c0_3] : memref<32x128xbf16, #tpu.memory_space<vmem>>, vector<32x128xbf16>
    %c0_4 = arith.constant 0 : index
    %c0_5 = arith.constant 0 : index
    %5 = vector.load %arg4[%c0_4, %c0_5] : memref<128x128xbf16, #tpu.memory_space<vmem>>, vector<128x128xbf16>
    %cst = arith.constant dense<0.000000e+00> : vector<32x128xf32>
    %6 = tpu.matmul %4, %5, %cst {dimension_numbers = #tpu.dot_dimension_numbers<[1], [0], [0], [1], [0, 0, 1, 1], [], []>} : vector<32x128xbf16>, vector<128x128xbf16>, vector<32x128xf32> -> vector<32x128xf32>
    %7 = arith.addf %3, %6 : vector<32x128xf32>
    %c0_6 = arith.constant 0 : index
    %c0_7 = arith.constant 0 : index
    %8 = vector.load %arg8[%c0_6, %c0_7] : memref<32x128xf32, #tpu.memory_space<vmem>>, vector<32x128xf32>
    tpu.vector_store %arg8[%c0_6, %c0_7], %7 {strides = array<i32>} : memref<32x128xf32, #tpu.memory_space<vmem>>, vector<32x128xf32>,
    %c0_i32_8 = arith.constant 0 : i32
    %9 = arith.cmpi eq, %arg2, %c0_i32_8 : i32
    %10 = arith.extui %9 : i1 to i32
    %c0_i32_9 = arith.constant 0 : i32
    %11 = arith.cmpi ne, %10, %c0_i32_9 : i32
    scf.if %11 {
      %c0_10 = arith.constant 0 : index
      %c0_11 = arith.constant 0 : index
      %12 = vector.load %arg8[%c0_10, %c0_11] : memref<32x128xf32, #tpu.memory_space<vmem>>, vector<32x128xf32>
      %c0_12 = arith.constant 0 : index
      %c0_13 = arith.constant 0 : index
      %13 = vector.load %arg5[%c0_12, %c0_13] : memref<1x128xf32, #tpu.memory_space<vmem>>, vector<1x128xf32>
      %14 = vector.broadcast %13 : vector<1x128xf32> to vector<32x128xf32>
      %15 = arith.addf %12, %14 : vector<32x128xf32>
      %c0_14 = arith.constant 0 : index
      %c0_15 = arith.constant 0 : index
      %16 = vector.load %arg6[%c0_14, %c0_15] : memref<32x128xbf16, #tpu.memory_space<vmem>>, vector<32x128xbf16>
      %17 = arith.extf %16 : vector<32x128xbf16> to vector<32x128xf32>
      %18 = arith.addf %15, %17 : vector<32x128xf32>
      %cst_16 = arith.constant 0.000000e+00 : f32
      %19 = vector.broadcast %cst_16 : f32 to vector<32x128xf32>
      %20 = arith.maximumf %18, %19 : vector<32x128xf32>
      %c0_17 = arith.constant 0 : index
      %c0_18 = arith.constant 0 : index
      %21 = vector.load %arg7[%c0_17, %c0_18] : memref<32x128xf32, #tpu.memory_space<vmem>>, vector<32x128xf32>
      tpu.vector_store %arg7[%c0_17, %c0_18], %20 {strides = array<i32>} : memref<32x128xf32, #tpu.memory_space<vmem>>, vector<32x128xf32>,
    } else {
    }
    return
  }
  func.func @transform_0(%arg0: i32, %arg1: i32, %arg2: i32) -> (i32, i32) {
    %c0_i32 = arith.constant 0 : i32
    return %arg0, %arg2 : i32, i32
  }
  func.func @transform_1(%arg0: i32, %arg1: i32, %arg2: i32) -> (i32, i32) {
    %c0_i32 = arith.constant 0 : i32
    return %arg2, %arg1 : i32, i32
  }
  func.func @transform_2(%arg0: i32, %arg1: i32, %arg2: i32) -> (i32, i32) {
    %c0_i32 = arith.constant 0 : i32
    %c0_i32_0 = arith.constant 0 : i32
    return %c0_i32, %arg1 : i32, i32
  }
  func.func @transform_3(%arg0: i32, %arg1: i32, %arg2: i32) -> (i32, i32) {
    %c0_i32 = arith.constant 0 : i32
    return %arg0, %arg1 : i32, i32
  }
  func.func @transform_4(%arg0: i32, %arg1: i32, %arg2: i32) -> (i32, i32) {
    %c0_i32 = arith.constant 0 : i32
    return %arg0, %arg1 : i32, i32
  }
}

</mosaic_0001>

<llo_original>
// kernel: block_forward.4
$region0: #{block_forward.4}
  #allocation0 [shape = 'u32[]', space=smem, size = 0x4, offset = 0x4, fixed_abs, tag = 'smem constant byte address 0x4 - core index']
  #allocation1 [shape = 'u32[72,128]{1,0:T(1,128)}', space=vmem, size = 0x9000, scoped, tag = 'internal scratch']
  #allocation2 [shape = 'f32[128,128]{1,0:T(8,128)}', space=vmem, size = 0x10000, scoped, tag = 'scratch operand']
  %s0 = inlined_call_operand.vmem [shape: bf16[128,8], index: 0, kind: input, shape index: {}]
  %s1 = inlined_call_operand.vmem [shape: bf16[8,128], index: 1, kind: input, shape index: {}]
  %s2 = inlined_call_operand.vmem [shape: f32[1,128], index: 2, kind: input, shape index: {}]
  %s3 = inlined_call_operand.vmem [shape: f32[128,128], index: 3, kind: output, shape index: {}]
  %s4 = sld [smem:[#allocation0]]
  $region30: #{block_forward.4} parent=0
    _
  %s6 = ssub.s32 1, %s4
  %s7 = scalar_select 0, %s6, %s4
  // Predicated region
  $region2: #{block_forward.4} parent=0 // pred_check
    _
  $region3: #{block_forward.4} parent=0 // pred_check_branch
    %9 = sbr.rel (0) target = $region5
  $region4: #{block_forward.4} parent=0 // pred_region
    _
  $region5: #{block_forward.4} parent=0 // pred_fallthru
    _
  // Predicated region
  $region6: #{block_forward.4} parent=0 // pred_check
    _
  $region7: #{block_forward.4} parent=0 // pred_check_branch
    %11 = sbr.rel (0) target = $region9
  $region8: #{block_forward.4} parent=0 // pred_region
    _
  $region9: #{block_forward.4} parent=0 // pred_fallthru
    _
  // Predicated region
  $region10: #{block_forward.4} parent=0 // pred_check
    _
  $region11: #{block_forward.4} parent=0 // pred_check_branch
    %13 = sbr.rel (0) target = $region13
  $region12: #{block_forward.4} parent=0 // pred_region
    _
  $region13: #{block_forward.4} parent=0 // pred_fallthru
    _
  %p15 = scmp.eq.s32.totalorder 0, 0
  // Predicated region
  $region14: #{block_forward.4} parent=0 // pred_check
    %p16 = pneg %p15
  $region15: #{block_forward.4} parent=0 // pred_check_branch
    %18 = sbr.rel (%p16) target = $region17
  $region16: #{block_forward.4} parent=0 // pred_region
    %19 = vst [vmem:[#allocation2] sm:$0xff] 0.0
    %20 = vst [vmem:[#allocation2 + $0x8] sm:$0xff] 0.0
    %21 = vst [vmem:[#allocation2 + $0x10] sm:$0xff] 0.0
    %22 = vst [vmem:[#allocation2 + $0x18] sm:$0xff] 0.0
    %23 = vst [vmem:[#allocation2 + $0x20] sm:$0xff] 0.0
    %24 = vst [vmem:[#allocation2 + $0x28] sm:$0xff] 0.0
    %25 = vst [vmem:[#allocation2 + $0x30] sm:$0xff] 0.0
    %26 = vst [vmem:[#allocation2 + $0x38] sm:$0xff] 0.0
    %27 = vst [vmem:[#allocation2 + $0x40] sm:$0xff] 0.0
    %28 = vst [vmem:[#allocation2 + $0x48] sm:$0xff] 0.0
    %29 = vst [vmem:[#allocation2 + $0x50] sm:$0xff] 0.0
    %30 = vst [vmem:[#allocation2 + $0x58] sm:$0xff] 0.0
    %31 = vst [vmem:[#allocation2 + $0x60] sm:$0xff] 0.0
    %32 = vst [vmem:[#allocation2 + $0x68] sm:$0xff] 0.0
    %33 = vst [vmem:[#allocation2 + $0x70] sm:$0xff] 0.0
    %34 = vst [vmem:[#allocation2 + $0x78] sm:$0xff] 0.0
  $region17: #{block_forward.4} parent=0 // pred_fallthru
    _
  %v35 = vld [vmem:[#allocation2] sm:$0xff]
  %v36 = vld [vmem:[#allocation2 + $0x8] sm:$0xff]
  %v37 = vld [vmem:[#allocation2 + $0x10] sm:$0xff]
  %v38 = vld [vmem:[#allocation2 + $0x18] sm:$0xff]
  %v39 = vld [vmem:[#allocation2 + $0x20] sm:$0xff]
  %v40 = vld [vmem:[#allocation2 + $0x28] sm:$0xff]
  %v41 = vld [vmem:[#allocation2 + $0x30] sm:$0xff]
  %v42 = vld [vmem:[#allocation2 + $0x38] sm:$0xff]
  %v43 = vld [vmem:[#allocation2 + $0x40] sm:$0xff]
  %v44 = vld [vmem:[#allocation2 + $0x48] sm:$0xff]
  %v45 = vld [vmem:[#allocation2 + $0x50] sm:$0xff]
  %v46 = vld [vmem:[#allocation2 + $0x58] sm:$0xff]
  %v47 = vld [vmem:[#allocation2 + $0x60] sm:$0xff]
  %v48 = vld [vmem:[#allocation2 + $0x68] sm:$0xff]
  %v49 = vld [vmem:[#allocation2 + $0x70] sm:$0xff]
  %v50 = vld [vmem:[#allocation2 + $0x78] sm:$0xff]
  %v51 = vld [vmem:[%s0] sm:$0xf]
  %v52 = vld [vmem:[%s0 + $0x4] sm:$0xf]
  %v53 = vld [vmem:[%s0 + $0x8] sm:$0xf]
  %v54 = vld [vmem:[%s0 + $0xc] sm:$0xf]
  %v55 = vld [vmem:[%s0 + $0x10] sm:$0xf]
  %v56 = vld [vmem:[%s0 + $0x14] sm:$0xf]
  %v57 = vld [vmem:[%s0 + $0x18] sm:$0xf]
  %v58 = vld [vmem:[%s0 + $0x1c] sm:$0xf]
  %v59 = vld [vmem:[%s0 + $0x20] sm:$0xf]
  %v60 = vld [vmem:[%s0 + $0x24] sm:$0xf]
  %v61 = vld [vmem:[%s0 + $0x28] sm:$0xf]
  %v62 = vld [vmem:[%s0 + $0x2c] sm:$0xf]
  %v63 = vld [vmem:[%s0 + $0x30] sm:$0xf]
  %v64 = vld [vmem:[%s0 + $0x34] sm:$0xf]
  %v65 = vld [vmem:[%s0 + $0x38] sm:$0xf]
  %v66 = vld [vmem:[%s0 + $0x3c] sm:$0xf]
  %v67 = vld [vmem:[%s1] sm:$0xf]
  %v84 = vunpack.c.l.b16 %v51
  %v85 = vunpack.c.l.b16 %v52
  %v86 = vunpack.c.l.b16 %v53
  %v87 = vunpack.c.l.b16 %v54
  %v88 = vunpack.c.l.b16 %v55
  %v89 = vunpack.c.l.b16 %v56
  %v90 = vunpack.c.l.b16 %v57
  %v91 = vunpack.c.l.b16 %v58
  %v92 = vunpack.c.l.b16 %v59
  %v93 = vunpack.c.l.b16 %v60
  %v94 = vunpack.c.l.b16 %v61
  %v95 = vunpack.c.l.b16 %v62
  %v96 = vunpack.c.l.b16 %v63
  %v97 = vunpack.c.l.b16 %v64
  %v98 = vunpack.c.l.b16 %v65
  %v99 = vunpack.c.l.b16 %v66
  %v100 = vpack.c.b16 %v85, %v84
  %v101 = vpack.c.b16 %v87, %v86
  %v102 = vpack.c.b16 %v89, %v88
  %v103 = vpack.c.b16 %v91, %v90
  %v104 = vpack.c.b16 %v93, %v92
  %v105 = vpack.c.b16 %v95, %v94
  %v106 = vpack.c.b16 %v97, %v96
  %v107 = vpack.c.b16 %v99, %v98
  %vm108 = vcmask 64512
  %v110 = vsel %vm108, %v100, 0
  %v113 = vsel %vm108, %v101, 0
  %v116 = vsel %vm108, %v102, 0
  %v119 = vsel %vm108, %v103, 0
  %v122 = vsel %vm108, %v104, 0
  %v125 = vsel %vm108, %v105, 0
  %v128 = vsel %vm108, %v106, 0
  %v131 = vsel %vm108, %v107, 0
  %vm133 = vcmask 1043456
  %v135 = vsel %vm133, %v67, 0
  %137 = vmatpush.bf16.msra.mxu0 0
  %138 = vmatpush.bf16.msra.mxu0 0
  %139 = vmatpush.bf16.msra.mxu0 0
  %140 = vmatpush.bf16.msra.mxu0 0
  %141 = vmatpush.bf16.msra.mxu0 0
  %142 = vmatpush.bf16.msra.mxu0 0
  %143 = vmatpush.bf16.msra.mxu0 0
  %144 = vmatpush.bf16.msra.mxu0 %v135
  %145 = vmatmul.bf16.gmra.mxu0 %v110
  %v146 = vpop.f32.mrf.mxu0
  %v147 = vadd.f32 0.0, %v146
  %v148 = vpop.f32.mrf.mxu0
  %v149 = vadd.f32 0.0, %v148
  %150 = vmatmul.bf16.gmra.mxu0 %v113
  %v151 = vpop.f32.mrf.mxu0
  %v152 = vadd.f32 0.0, %v151
  %v153 = vpop.f32.mrf.mxu0
  %v154 = vadd.f32 0.0, %v153
  %155 = vmatmul.bf16.gmra.mxu0 %v116
  %v156 = vpop.f32.mrf.mxu0
  %v157 = vadd.f32 0.0, %v156
  %v158 = vpop.f32.mrf.mxu0
  %v159 = vadd.f32 0.0, %v158
  %160 = vmatmul.bf16.gmra.mxu0 %v119
  %v161 = vpop.f32.mrf.mxu0
  %v162 = vadd.f32 0.0, %v161
  %v163 = vpop.f32.mrf.mxu0
  %v164 = vadd.f32 0.0, %v163
  %165 = vmatmul.bf16.gmra.mxu0 %v122
  %v166 = vpop.f32.mrf.mxu0
  %v167 = vadd.f32 0.0, %v166
  %v168 = vpop.f32.mrf.mxu0
  %v169 = vadd.f32 0.0, %v168
  %170 = vmatmul.bf16.gmra.mxu0 %v125
  %v171 = vpop.f32.mrf.mxu0
  %v172 = vadd.f32 0.0, %v171
  %v173 = vpop.f32.mrf.mxu0
  %v174 = vadd.f32 0.0, %v173
  %175 = vmatmul.bf16.gmra.mxu0 %v128
  %v176 = vpop.f32.mrf.mxu0
  %v177 = vadd.f32 0.0, %v176
  %v178 = vpop.f32.mrf.mxu0
  %v179 = vadd.f32 0.0, %v178
  %180 = vmatmul.bf16.gmra.mxu0 %v131
  %v181 = vpop.f32.mrf.mxu0
  %v182 = vadd.f32 0.0, %v181
  %v183 = vpop.f32.mrf.mxu0
  %v184 = vadd.f32 0.0, %v183
  %185 = vdwg.mxu0
  %v186 = vadd.f32 %v35, %v147
  %v187 = vadd.f32 %v36, %v149
  %v188 = vadd.f32 %v37, %v152
  %v189 = vadd.f32 %v38, %v154
  %v190 = vadd.f32 %v39, %v157
  %v191 = vadd.f32 %v40, %v159
  %v192 = vadd.f32 %v41, %v162
  %v193 = vadd.f32 %v42, %v164
  %v194 = vadd.f32 %v43, %v167
  %v195 = vadd.f32 %v44, %v169
  %v196 = vadd.f32 %v45, %v172
  %v197 = vadd.f32 %v46, %v174
  %v198 = vadd.f32 %v47, %v177
  %v199 = vadd.f32 %v48, %v179
  %v200 = vadd.f32 %v49, %v182
  %v201 = vadd.f32 %v50, %v184
  %202 = vst [vmem:[#allocation2] sm:$0xff] %v186
  %203 = vst [vmem:[#allocation2 + $0x8] sm:$0xff] %v187
  %204 = vst [vmem:[#allocation2 + $0x10] sm:$0xff] %v188
  %205 = vst [vmem:[#allocation2 + $0x18] sm:$0xff] %v189
  %206 = vst [vmem:[#allocation2 + $0x20] sm:$0xff] %v190
  %207 = vst [vmem:[#allocation2 + $0x28] sm:$0xff] %v191
  %208 = vst [vmem:[#allocation2 + $0x30] sm:$0xff] %v192
  %209 = vst [vmem:[#allocation2 + $0x38] sm:$0xff] %v193
  %210 = vst [vmem:[#allocation2 + $0x40] sm:$0xff] %v194
  %211 = vst [vmem:[#allocation2 + $0x48] sm:$0xff] %v195
  %212 = vst [vmem:[#allocation2 + $0x50] sm:$0xff] %v196
  %213 = vst [vmem:[#allocation2 + $0x58] sm:$0xff] %v197
  %214 = vst [vmem:[#allocation2 + $0x60] sm:$0xff] %v198
  %215 = vst [vmem:[#allocation2 + $0x68] sm:$0xff] %v199
  %216 = vst [vmem:[#allocation2 + $0x70] sm:$0xff] %v200
  %217 = vst [vmem:[#allocation2 + $0x78] sm:$0xff] %v201
  // Predicated region
  $region18: #{block_forward.4} parent=0 // pred_check
    %p218 = pneg %p15
  $region19: #{block_forward.4} parent=0 // pred_check_branch
    %220 = sbr.rel (%p218) target = $region21
  $region20: #{block_forward.4} parent=0 // pred_region
    %v221 = vld [vmem:[#allocation2] sm:$0xff]
    %v222 = vld [vmem:[#allocation2 + $0x8] sm:$0xff]
    %v223 = vld [vmem:[#allocation2 + $0x10] sm:$0xff]
    %v224 = vld [vmem:[#allocation2 + $0x18] sm:$0xff]
    %v225 = vld [vmem:[#allocation2 + $0x20] sm:$0xff]
    %v226 = vld [vmem:[#allocation2 + $0x28] sm:$0xff]
    %v227 = vld [vmem:[#allocation2 + $0x30] sm:$0xff]
    %v228 = vld [vmem:[#allocation2 + $0x38] sm:$0xff]
    %v229 = vld [vmem:[#allocation2 + $0x40] sm:$0xff]
    %v230 = vld [vmem:[#allocation2 + $0x48] sm:$0xff]
    %v231 = vld [vmem:[#allocation2 + $0x50] sm:$0xff]
    %v232 = vld [vmem:[#allocation2 + $0x58] sm:$0xff]
    %v233 = vld [vmem:[#allocation2 + $0x60] sm:$0xff]
    %v234 = vld [vmem:[#allocation2 + $0x68] sm:$0xff]
    %v235 = vld [vmem:[#allocation2 + $0x70] sm:$0xff]
    %v236 = vld [vmem:[#allocation2 + $0x78] sm:$0xff]
    %v237 = vld [vmem:[%s2] sm:$0x1]
    %v239 = vperm.slane %v237, 0
    %v241 = vadd.f32 %v221, %v239
    %v242 = vadd.f32 %v222, %v239
    %v243 = vadd.f32 %v223, %v239
    %v244 = vadd.f32 %v224, %v239
    %v245 = vadd.f32 %v225, %v239
    %v246 = vadd.f32 %v226, %v239
    %v247 = vadd.f32 %v227, %v239
    %v248 = vadd.f32 %v228, %v239
    %v249 = vadd.f32 %v229, %v239
    %v250 = vadd.f32 %v230, %v239
    %v251 = vadd.f32 %v231, %v239
    %v252 = vadd.f32 %v232, %v239
    %v253 = vadd.f32 %v233, %v239
    %v254 = vadd.f32 %v234, %v239
    %v255 = vadd.f32 %v235, %v239
    %v256 = vadd.f32 %v236, %v239
    %v257 = vmax.f32 %v241, 0.0
    %v258 = vmax.f32 %v242, 0.0
    %v259 = vmax.f32 %v243, 0.0
    %v260 = vmax.f32 %v244, 0.0
    %v261 = vmax.f32 %v245, 0.0
    %v262 = vmax.f32 %v246, 0.0
    %v263 = vmax.f32 %v247, 0.0
    %v264 = vmax.f32 %v248, 0.0
    %v265 = vmax.f32 %v249, 0.0
    %v266 = vmax.f32 %v250, 0.0
    %v267 = vmax.f32 %v251, 0.0
    %v268 = vmax.f32 %v252, 0.0
    %v269 = vmax.f32 %v253, 0.0
    %v270 = vmax.f32 %v254, 0.0
    %v271 = vmax.f32 %v255, 0.0
    %v272 = vmax.f32 %v256, 0.0
    %273 = vst [vmem:[%s3] sm:$0xff] %v257
    %274 = vst [vmem:[%s3 + $0x8] sm:$0xff] %v258
    %275 = vst [vmem:[%s3 + $0x10] sm:$0xff] %v259
    %276 = vst [vmem:[%s3 + $0x18] sm:$0xff] %v260
    %277 = vst [vmem:[%s3 + $0x20] sm:$0xff] %v261
    %278 = vst [vmem:[%s3 + $0x28] sm:$0xff] %v262
    %279 = vst [vmem:[%s3 + $0x30] sm:$0xff] %v263
    %280 = vst [vmem:[%s3 + $0x38] sm:$0xff] %v264
    %281 = vst [vmem:[%s3 + $0x40] sm:$0xff] %v265
    %282 = vst [vmem:[%s3 + $0x48] sm:$0xff] %v266
    %283 = vst [vmem:[%s3 + $0x50] sm:$0xff] %v267
    %284 = vst [vmem:[%s3 + $0x58] sm:$0xff] %v268
    %285 = vst [vmem:[%s3 + $0x60] sm:$0xff] %v269
    %286 = vst [vmem:[%s3 + $0x68] sm:$0xff] %v270
    %287 = vst [vmem:[%s3 + $0x70] sm:$0xff] %v271
    %288 = vst [vmem:[%s3 + $0x78] sm:$0xff] %v272
  $region21: #{block_forward.4} parent=0 // pred_fallthru
    _
  // Predicated region
  $region22: #{block_forward.4} parent=0 // pred_check
    _
  $region23: #{block_forward.4} parent=0 // pred_check_branch
    %290 = sbr.rel (0) target = $region25
  $region24: #{block_forward.4} parent=0 // pred_region
    _
  $region25: #{block_forward.4} parent=0 // pred_fallthru
    _
  // Predicated region
  $region26: #{block_forward.4} parent=0 // pred_check
    _
  $region27: #{block_forward.4} parent=0 // pred_check_branch
    %292 = sbr.rel (0) target = $region29
  $region28: #{block_forward.4} parent=0 // pred_region
    _
  $region29: #{block_forward.4} parent=0 // pred_fallthru
    _

// kernel: block_forward.6
$region0: #{block_forward.6}
  #allocation0 [shape = 'u32[]', space=smem, size = 0x4, offset = 0x4, fixed_abs, tag = 'smem constant byte address 0x4 - core index']
  #allocation1 [shape = 'u32[72,128]{1,0:T(1,128)}', space=vmem, size = 0x9000, scoped, tag = 'internal scratch']
  #allocation2 [shape = 'f32[32,128]{1,0:T(8,128)}', space=vmem, size = 0x4000, scoped, tag = 'scratch operand']
  %s0 = inlined_call_operand.vmem [shape: bf16[32,8], index: 0, kind: input, shape index: {}]
  %s1 = inlined_call_operand.vmem [shape: bf16[8,128], index: 1, kind: input, shape index: {}]
  %s2 = inlined_call_operand.vmem [shape: f32[1,128], index: 2, kind: input, shape index: {}]
  %s3 = inlined_call_operand.vmem [shape: bf16[32,128], index: 3, kind: output, shape index: {}]
  %s4 = sld [smem:[#allocation0]]
  $region30: #{block_forward.6} parent=0
    _
  %s6 = ssub.s32 1, %s4
  %s7 = scalar_select 0, %s6, %s4
  // Predicated region
  $region2: #{block_forward.6} parent=0 // pred_check
    _
  $region3: #{block_forward.6} parent=0 // pred_check_branch
    %9 = sbr.rel (0) target = $region5
  $region4: #{block_forward.6} parent=0 // pred_region
    _
  $region5: #{block_forward.6} parent=0 // pred_fallthru
    _
  // Predicated region
  $region6: #{block_forward.6} parent=0 // pred_check
    _
  $region7: #{block_forward.6} parent=0 // pred_check_branch
    %11 = sbr.rel (0) target = $region9
  $region8: #{block_forward.6} parent=0 // pred_region
    _
  $region9: #{block_forward.6} parent=0 // pred_fallthru
    _
  // Predicated region
  $region10: #{block_forward.6} parent=0 // pred_check
    _
  $region11: #{block_forward.6} parent=0 // pred_check_branch
    %13 = sbr.rel (0) target = $region13
  $region12: #{block_forward.6} parent=0 // pred_region
    _
  $region13: #{block_forward.6} parent=0 // pred_fallthru
    _
  %p15 = scmp.eq.s32.totalorder 0, 0
  // Predicated region
  $region14: #{block_forward.6} parent=0 // pred_check
    %p16 = pneg %p15
  $region15: #{block_forward.6} parent=0 // pred_check_branch
    %18 = sbr.rel (%p16) target = $region17
  $region16: #{block_forward.6} parent=0 // pred_region
    %19 = vst [vmem:[#allocation2] sm:$0xff] 0.0
    %20 = vst [vmem:[#allocation2 + $0x8] sm:$0xff] 0.0
    %21 = vst [vmem:[#allocation2 + $0x10] sm:$0xff] 0.0
    %22 = vst [vmem:[#allocation2 + $0x18] sm:$0xff] 0.0
  $region17: #{block_forward.6} parent=0 // pred_fallthru
    _
  %v23 = vld [vmem:[#allocation2] sm:$0xff]
  %v24 = vld [vmem:[#allocation2 + $0x8] sm:$0xff]
  %v25 = vld [vmem:[#allocation2 + $0x10] sm:$0xff]
  %v26 = vld [vmem:[#allocation2 + $0x18] sm:$0xff]
  %v27 = vld [vmem:[%s0] sm:$0xf]
  %v28 = vld [vmem:[%s0 + $0x4] sm:$0xf]
  %v29 = vld [vmem:[%s0 + $0x8] sm:$0xf]
  %v30 = vld [vmem:[%s0 + $0xc] sm:$0xf]
  %v31 = vld [vmem:[%s1] sm:$0xf]
  %v36 = vunpack.c.l.b16 %v27
  %v37 = vunpack.c.l.b16 %v28
  %v38 = vunpack.c.l.b16 %v29
  %v39 = vunpack.c.l.b16 %v30
  %v40 = vpack.c.b16 %v37, %v36
  %v41 = vpack.c.b16 %v39, %v38
  %vm42 = vcmask 64512
  %v44 = vsel %vm42, %v40, 0
  %v47 = vsel %vm42, %v41, 0
  %vm49 = vcmask 1043456
  %v51 = vsel %vm49, %v31, 0
  %53 = vmatpush.bf16.msra.mxu0 0
  %54 = vmatpush.bf16.msra.mxu0 0
  %55 = vmatpush.bf16.msra.mxu0 0
  %56 = vmatpush.bf16.msra.mxu0 0
  %57 = vmatpush.bf16.msra.mxu0 0
  %58 = vmatpush.bf16.msra.mxu0 0
  %59 = vmatpush.bf16.msra.mxu0 0
  %60 = vmatpush.bf16.msra.mxu0 %v51
  %61 = vmatmul.bf16.gmra.mxu0 %v44
  %v62 = vpop.f32.mrf.mxu0
  %v63 = vadd.f32 0.0, %v62
  %v64 = vpop.f32.mrf.mxu0
  %v65 = vadd.f32 0.0, %v64
  %66 = vmatmul.bf16.gmra.mxu0 %v47
  %v67 = vpop.f32.mrf.mxu0
  %v68 = vadd.f32 0.0, %v67
  %v69 = vpop.f32.mrf.mxu0
  %v70 = vadd.f32 0.0, %v69
  %71 = vdwg.mxu0
  %v72 = vadd.f32 %v23, %v63
  %v73 = vadd.f32 %v24, %v65
  %v74 = vadd.f32 %v25, %v68
  %v75 = vadd.f32 %v26, %v70
  %76 = vst [vmem:[#allocation2] sm:$0xff] %v72
  %77 = vst [vmem:[#allocation2 + $0x8] sm:$0xff] %v73
  %78 = vst [vmem:[#allocation2 + $0x10] sm:$0xff] %v74
  %79 = vst [vmem:[#allocation2 + $0x18] sm:$0xff] %v75
  // Predicated region
  $region18: #{block_forward.6} parent=0 // pred_check
    %p80 = pneg %p15
  $region19: #{block_forward.6} parent=0 // pred_check_branch
    %82 = sbr.rel (%p80) target = $region21
  $region20: #{block_forward.6} parent=0 // pred_region
    %v83 = vld [vmem:[#allocation2] sm:$0xff]
    %v84 = vld [vmem:[#allocation2 + $0x8] sm:$0xff]
    %v85 = vld [vmem:[#allocation2 + $0x10] sm:$0xff]
    %v86 = vld [vmem:[#allocation2 + $0x18] sm:$0xff]
    %v87 = vld [vmem:[%s2] sm:$0x1]
    %v89 = vperm.slane %v87, 0
    %v91 = vadd.f32 %v83, %v89
    %v92 = vadd.f32 %v84, %v89
    %v93 = vadd.f32 %v85, %v89
    %v94 = vadd.f32 %v86, %v89
    %v95 = vpack.c.bf16 %v91, %v91
    %v96 = vpack.c.bf16 %v92, %v92
    %v97 = vpack.c.bf16 %v93, %v93
    %v98 = vpack.c.bf16 %v94, %v94
    %99 = vst [vmem:[%s3] sm:$0xf] %v95
    %100 = vst [vmem:[%s3 + $0x4] sm:$0xf] %v96
    %101 = vst [vmem:[%s3 + $0x8] sm:$0xf] %v97
    %102 = vst [vmem:[%s3 + $0xc] sm:$0xf] %v98
  $region21: #{block_forward.6} parent=0 // pred_fallthru
    _
  // Predicated region
  $region22: #{block_forward.6} parent=0 // pred_check
    _
  $region23: #{block_forward.6} parent=0 // pred_check_branch
    %104 = sbr.rel (0) target = $region25
  $region24: #{block_forward.6} parent=0 // pred_region
    _
  $region25: #{block_forward.6} parent=0 // pred_fallthru
    _
  // Predicated region
  $region26: #{block_forward.6} parent=0 // pred_check
    _
  $region27: #{block_forward.6} parent=0 // pred_check_branch
    %106 = sbr.rel (0) target = $region29
  $region28: #{block_forward.6} parent=0 // pred_region
    _
  $region29: #{block_forward.6} parent=0 // pred_fallthru
    _

// kernel: block_forward.5
$region0: #{block_forward.5}
  #allocation0 [shape = 'u32[]', space=smem, size = 0x4, offset = 0x4, fixed_abs, tag = 'smem constant byte address 0x4 - core index']
  #allocation1 [shape = 'u32[72,128]{1,0:T(1,128)}', space=vmem, size = 0x9000, scoped, tag = 'internal scratch']
  %s0 = inlined_call_operand.vmem [shape: f32[2,5,9,512], index: 0, kind: input, shape index: {}]
  %s1 = inlined_call_operand.vmem [shape: bf16[3,384,128], index: 1, kind: input, shape index: {}]
  %s2 = inlined_call_operand.vmem [shape: f32[1,128], index: 2, kind: input, shape index: {}]
  %s3 = inlined_call_operand.vmem [shape: bf16[2,32,128], index: 3, kind: output, shape index: {}]
  %s4 = sld [smem:[#allocation0]]
  $region45: #{block_forward.5} parent=0
    _
  %s6 = ssub.s32 1, %s4
  %s7 = scalar_select 0, %s6, %s4
  loop: start=0, step=1, limit=4
  $region2: #{block_forward.5} parent=0 // loop_pre_header
    _
  $region3: #{block_forward.5} parent=0 // loop_header
    %s9 = sphi 0, %s13
    %p10 = scmp.ge.s32.totalorder %s9, 4
    %s16 = sphi 0, %s35
    %s17 = sphi 0, %s31
    %s18 = sphi 0, %s27
    %s19 = sphi 0, %s16
    %s20 = sphi 0, %s17
    %s21 = sphi 0, %s18
    %s22 = sphi 0, %s19
    %s23 = sphi 0, %s20
    %s24 = sphi 0, %s21
    %s38 = sphi 0, %s40
    %s41 = sphi 0, %s38
    %s42 = sphi 0, %s41
    %s58 = sphi 0, %s42
    %s64 = sphi 0, %s66
    %s67 = sphi 0, %s64
    %s68 = sphi 0, %s67
    %s84 = sphi 0, %s68
    %s90 = sphi 0, %s92
    %s93 = sphi 0, %s90
    %s94 = sphi 0, %s93
    %s110 = sphi 0, %s94
    %s120 = sphi 0, %s122
    %s123 = sphi 0, %s120
    %s124 = sphi 0, %s123
    %s140 = sphi 0, %s124
  $region4: #{block_forward.5} parent=0 // loop_header_branch
    %12 = sbr.rel (%p10) target = $region8
  $region5: #{block_forward.5} parent=0 // loop_body
    %s14 = ssub.s32 %s9, 1
    %s15 = ssub.s32 %s9, 2
    %s25 = sadd.s32 1, %s18
    %p26 = scmp.ge.s32.totalorder %s25, 1
    %s27 = scalar_select %p26, 0, %s25
    %s28 = sadd.s32 1, %s17
    %s29 = scalar_select %p26, %s28, %s17
    %p30 = scmp.ge.s32.totalorder %s29, 1
    %s31 = scalar_select %p30, 0, %s29
    %s32 = sadd.s32 1, %s16
    %s33 = scalar_select %p30, %s32, %s16
    %p34 = scmp.ge.s32.totalorder %s33, 2
    %s35 = scalar_select %p34, 0, %s33
    %s36 = ssub.s32 %s16, %s35
    %p37 = scmp.eq.s32.totalorder %s36, 0
    %s39 = sadd.s32 %s38, 1
    %s40 = scalar_select %p37, %s38, %s39
    %p43 = pneg %p37
    %p44 = scmp.eq.s32.totalorder %s9, 1
    %p45 = por %p43, %p44
    %p46 = scmp.ne.s32.totalorder %s38, %s41
    %p47 = scmp.eq.s32.totalorder %s9, 0
    %p48 = por %p46, %p47
    %p49 = scmp.ne.s32.totalorder %s38, %s41
    %p50 = scmp.eq.s32.totalorder %s14, 1
    %p51 = por %p49, %p50
    %p52 = scmp.ne.s32.totalorder %s41, %s42
    %p53 = scmp.eq.s32.totalorder %s14, 0
    %p54 = por %p52, %p53
    %p55 = scmp.ne.s32.totalorder %s41, %s42
    %p56 = scmp.eq.s32.totalorder %s15, 1
    %p57 = por %p55, %p56
    %p59 = scmp.ne.s32.totalorder %s42, %s58
    %p60 = scmp.eq.s32.totalorder %s15, 0
    %p61 = por %p59, %p60
    %s62 = ssub.s32 %s18, %s27
    %p63 = scmp.eq.s32.totalorder %s62, 0
    %s65 = sadd.s32 %s64, 1
    %s66 = scalar_select %p63, %s64, %s65
    %p69 = pneg %p63
    %p70 = scmp.eq.s32.totalorder %s9, 1
    %p71 = por %p69, %p70
    %p72 = scmp.ne.s32.totalorder %s64, %s67
    %p73 = scmp.eq.s32.totalorder %s9, 0
    %p74 = por %p72, %p73
    %p75 = scmp.ne.s32.totalorder %s64, %s67
    %p76 = scmp.eq.s32.totalorder %s14, 1
    %p77 = por %p75, %p76
    %p78 = scmp.ne.s32.totalorder %s67, %s68
    %p79 = scmp.eq.s32.totalorder %s14, 0
    %p80 = por %p78, %p79
    %p81 = scmp.ne.s32.totalorder %s67, %s68
    %p82 = scmp.eq.s32.totalorder %s15, 1
    %p83 = por %p81, %p82
    %p85 = scmp.ne.s32.totalorder %s68, %s84
    %p86 = scmp.eq.s32.totalorder %s15, 0
    %p87 = por %p85, %p86
    %s88 = ssub.s32 %s18, %s27
    %p89 = scmp.eq.s32.totalorder %s88, 0
    %s91 = sadd.s32 %s90, 1
    %s92 = scalar_select %p89, %s90, %s91
    %p95 = pneg %p89
    %p96 = scmp.eq.s32.totalorder %s9, 1
    %p97 = por %p95, %p96
    %p98 = scmp.ne.s32.totalorder %s90, %s93
    %p99 = scmp.eq.s32.totalorder %s9, 0
    %p100 = por %p98, %p99
    %p101 = scmp.ne.s32.totalorder %s90, %s93
    %p102 = scmp.eq.s32.totalorder %s14, 1
    %p103 = por %p101, %p102
    %p104 = scmp.ne.s32.totalorder %s93, %s94
    %p105 = scmp.eq.s32.totalorder %s14, 0
    %p106 = por %p104, %p105
    %p107 = scmp.ne.s32.totalorder %s93, %s94
    %p108 = scmp.eq.s32.totalorder %s15, 1
    %p109 = por %p107, %p108
    %p111 = scmp.ne.s32.totalorder %s94, %s110
    %p112 = scmp.eq.s32.totalorder %s15, 0
    %p113 = por %p111, %p112
    %s114 = ssub.s32 %s16, %s35
    %s115 = ssub.s32 %s17, %s31
    %s116 = sor.u32 %s114, %s115
    %s117 = ssub.s32 %s18, %s27
    %s118 = sor.u32 %s116, %s117
    %p119 = scmp.eq.s32.totalorder %s118, 0
    %s121 = sadd.s32 %s120, 1
    %s122 = scalar_select %p119, %s120, %s121
    %p125 = pneg %p119
    %p126 = scmp.eq.s32.totalorder %s9, 1
    %p127 = por %p125, %p126
    %p128 = scmp.ne.s32.totalorder %s120, %s123
    %p129 = scmp.eq.s32.totalorder %s9, 0
    %p130 = por %p128, %p129
    %p131 = scmp.ne.s32.totalorder %s120, %s123
    %p132 = scmp.eq.s32.totalorder %s14, 1
    %p133 = por %p131, %p132
    %p134 = scmp.ne.s32.totalorder %s123, %s124
    %p135 = scmp.eq.s32.totalorder %s14, 0
    %p136 = por %p134, %p135
    %p137 = scmp.ne.s32.totalorder %s123, %s124
    %p138 = scmp.eq.s32.totalorder %s15, 1
    %p139 = por %p137, %p138
    %p141 = scmp.ne.s32.totalorder %s124, %s140
    %p142 = scmp.eq.s32.totalorder %s15, 0
    %p143 = por %p141, %p142
    %p144 = scmp.le.s32.totalorder 1, %s9
    %p145 = scmp.lt.s32.totalorder %s9, 3
    %p146 = pnand %p144, %p145
    %p147 = pneg %p146
    // Predicated region
    $region9: #{block_forward.5} parent=5 // pred_check
      _
    $region10: #{block_forward.5} parent=5 // pred_check_branch
      %149 = sbr.rel (%p146) target = $region12
    $region11: #{block_forward.5} parent=5 // pred_region
      %s150 = ssub.s32 %s9, 1
      // Predicated region
      $region13: #{block_forward.5} parent=11 // pred_check
        %p151 = pneg %p80
      $region14: #{block_forward.5} parent=11 // pred_check_branch
        %153 = sbr.rel (%p151) target = $region16
      $region15: #{block_forward.5} parent=11 // pred_region
        %p154 = scmp.lt.s32.totalorder %s21, 0
        %s155 = scalar_select %p154, %s21, 0
        %s156 = smul.addr %s155, 4
        %s157 = scalar_lea.vmem %s1, %s156
      $region16: #{block_forward.5} parent=11 // pred_fallthru
        _
      // Predicated region
      $region17: #{block_forward.5} parent=11 // pred_check
        %p158 = pneg %p106
      $region18: #{block_forward.5} parent=11 // pred_check_branch
        %160 = sbr.rel (%p158) target = $region20
      $region19: #{block_forward.5} parent=11 // pred_region
        %p161 = scmp.lt.s32.totalorder %s21, 0
        %s162 = scalar_select %p161, %s21, 0
        %s163 = scalar_lea.vmem %s2, %s162
      $region20: #{block_forward.5} parent=11 // pred_fallthru
        _
    $region12: #{block_forward.5} parent=5 // pred_fallthru
      _
    %p164 = scmp.lt.s32.totalorder %s9, 2
    // Predicated region
    $region21: #{block_forward.5} parent=5 // pred_check
      %p165 = pneg %p164
    $region22: #{block_forward.5} parent=5 // pred_check_branch
      %167 = sbr.rel (%p165) target = $region24
    $region23: #{block_forward.5} parent=5 // pred_region
      // Predicated region
      $region25: #{block_forward.5} parent=23 // pred_check
        %p168 = pneg %p48
      $region26: #{block_forward.5} parent=23 // pred_check_branch
        %170 = sbr.rel (%p168) target = $region28
      $region27: #{block_forward.5} parent=23 // pred_region
        %p171 = scmp.lt.s32.totalorder %s16, 1
        %s172 = scalar_select %p171, %s16, 1
        %s173 = smul.addr %s172, 40
        %s174 = smul.addr %s173, 8
        %s175 = scalar_lea.vmem %s0, %s174
      $region28: #{block_forward.5} parent=23 // pred_fallthru
        _
    $region24: #{block_forward.5} parent=5 // pred_fallthru
      _
    %p176 = scmp.le.s32.totalorder 1, %s9
    %p177 = scmp.lt.s32.totalorder %s9, 3
    %p178 = pnand %p176, %p177
    %p179 = pneg %p178
    // Predicated region
    $region29: #{block_forward.5} parent=5 // pred_check
      _
    $region30: #{block_forward.5} parent=5 // pred_check_branch
      %181 = sbr.rel (%p178) target = $region32
    $region31: #{block_forward.5} parent=5 // pred_region
      %s182 = ssub.s32 %s9, 1
      %p183 = scmp.lt.s32.totalorder %s19, 1
      %s184 = scalar_select %p183, %s19, 1
      %s185 = smul.addr %s184, 40
      %s186 = smul.addr %s185, 8
      %s187 = scalar_lea.vmem %s0, %s186
      %p188 = pneg %p54
      %p189 = pneg %p51
      %p190 = scmp.lt.s32.totalorder %s21, 0
      %s191 = scalar_select %p190, %s21, 0
      %s192 = smul.addr %s191, 4
      %s193 = scalar_lea.vmem %s1, %s192
      %p194 = pneg %p80
      %p195 = pneg %p77
      %p196 = scmp.lt.s32.totalorder %s21, 0
      %s197 = scalar_select %p196, %s21, 0
      %s198 = scalar_lea.vmem %s2, %s197
      %p199 = pneg %p106
      %p200 = pneg %p103
      %p201 = pneg %p136
      %p202 = pneg %p133
      %s203 = smul.u32 4, %s20
      %p204 = scmp.lt.s32.totalorder %s19, 1
      %s205 = scalar_select %p204, %s19, 1
      %p206 = scmp.lt.s32.totalorder %s203, 3
      %s207 = scalar_select %p206, %s203, 3
      %p208 = scmp.lt.s32.totalorder %s21, 0
      %s209 = scalar_select %p208, %s21, 0
      %s210 = sadd.s32 %s209, %s207
      %s211 = smul.addr %s205, 4
      %s212 = sadd.s32 %s210, %s211
      %s213 = smul.addr %s212, 4
      %s214 = scalar_lea.vmem %s3, %s213
      %p215 = scmp.lt.s32.totalorder %s19, 1
      %s216 = scalar_select %p215, %s19, 1
      %s217 = smul.addr %s216, 40
      %s218 = smul.addr %s217, 8
      %s219 = scalar_lea.vmem %s0, %s218
      %p220 = scmp.lt.s32.totalorder %s21, 0
      %s221 = scalar_select %p220, %s21, 0
      %s222 = smul.addr %s221, 4
      %s223 = scalar_lea.vmem %s1, %s222
      %p224 = scmp.lt.s32.totalorder %s21, 0
      %s225 = scalar_select %p224, %s21, 0
      %s226 = scalar_lea.vmem %s2, %s225
      %s227 = smul.u32 4, %s20
      %p228 = scmp.lt.s32.totalorder %s19, 1
      %s229 = scalar_select %p228, %s19, 1
      %p230 = scmp.lt.s32.totalorder %s227, 3
      %s231 = scalar_select %p230, %s227, 3
      %p232 = scmp.lt.s32.totalorder %s21, 0
      %s233 = scalar_select %p232, %s21, 0
      %s234 = sadd.s32 %s233, %s231
      %s235 = smul.addr %s229, 4
      %s236 = sadd.s32 %s234, %s235
      %s237 = smul.addr %s236, 4
      %s238 = scalar_lea.vmem %s3, %s237
      %s239 = smul.u32 4, %s20
      %s240 = smul.u32 %s20, 4
      %s241 = smul.u32 %s240, 8
      %s242 = smul.addr %s241, 8
      %s243 = scalar_lea.vmem %s219, %s242
      %v244 = vld [vmem:[%s243] sm:$0xff]
      %v245 = vld [vmem:[%s243 + $0x40] sm:$0xff]
      %v246 = vld [vmem:[%s243 + $0x80] sm:$0xff]
      %v247 = vld [vmem:[%s243 + $0xc0] sm:$0xff]
      %v248 = vld [vmem:[%s243 + $0x8] sm:$0xff]
      %v249 = vld [vmem:[%s243 + $0x48] sm:$0xff]
      %v250 = vld [vmem:[%s243 + $0x88] sm:$0xff]
      %v251 = vld [vmem:[%s243 + $0xc8] sm:$0xff]
      %v252 = vld [vmem:[%s243] sm:$0xfe]
      %v253 = vld [vmem:[%s243 + $0x20] sm:$0x1]
      %v254 = vld [vmem:[%s243 + $0x40] sm:$0xfe]
      %v255 = vld [vmem:[%s243 + $0x60] sm:$0x1]
      %v256 = vld [vmem:[%s243 + $0x80] sm:$0xfe]
      %v257 = vld [vmem:[%s243 + $0xa0] sm:$0x1]
      %v258 = vld [vmem:[%s243 + $0xc0] sm:$0xfe]
      %v259 = vld [vmem:[%s243 + $0xe0] sm:$0x1]
      %vm268 = vcmask 1046528
      %v269 = vrot.slane %v252, 1
      %v270 = vrot.slane %v253, 1
      %v271 = vsel %vm268, %v269, %v270
      %v272 = vrot.slane %v254, 1
      %v273 = vrot.slane %v255, 1
      %v274 = vsel %vm268, %v272, %v273
      %v275 = vrot.slane %v256, 1
      %v276 = vrot.slane %v257, 1
      %v277 = vsel %vm268, %v275, %v276
      %v278 = vrot.slane %v258, 1
      %v279 = vrot.slane %v259, 1
      %v280 = vsel %vm268, %v278, %v279
      %v285 = vpack.c.bf16 %v245, %v244
      %v286 = vpack.c.bf16 %v249, %v248
      %v287 = vpack.c.bf16 %v274, %v271
      %v288 = vpack.c.bf16 %v247, %v246
      %v289 = vpack.c.bf16 %v251, %v250
      %v290 = vpack.c.bf16 %v280, %v277
      %v291 = vld [vmem:[%s223] sm:$0xf]
      %v292 = vld [vmem:[%s223 + $0x4] sm:$0xf]
      %v293 = vld [vmem:[%s223 + $0x8] sm:$0xf]
      %v294 = vld [vmem:[%s223 + $0xc] sm:$0xf]
      %v295 = vld [vmem:[%s223 + $0x10] sm:$0xf]
      %v296 = vld [vmem:[%s223 + $0x14] sm:$0xf]
      %v297 = vld [vmem:[%s223 + $0x18] sm:$0xf]
      %v298 = vld [vmem:[%s223 + $0x1c] sm:$0xf]
      %v299 = vld [vmem:[%s223 + $0x20] sm:$0xf]
      %v300 = vld [vmem:[%s223 + $0x24] sm:$0xf]
      %v301 = vld [vmem:[%s223 + $0x28] sm:$0xf]
      %v302 = vld [vmem:[%s223 + $0x2c] sm:$0xf]
      %v303 = vld [vmem:[%s223 + $0x30] sm:$0xf]
      %v304 = vld [vmem:[%s223 + $0x34] sm:$0xf]
      %v305 = vld [vmem:[%s223 + $0x38] sm:$0xf]
      %v306 = vld [vmem:[%s223 + $0x3c] sm:$0xf]
      %v307 = vld [vmem:[%s223 + $0x40] sm:$0xf]
      %v308 = vld [vmem:[%s223 + $0x44] sm:$0xf]
      %v309 = vld [vmem:[%s223 + $0x48] sm:$0xf]
      %v310 = vld [vmem:[%s223 + $0x4c] sm:$0xf]
      %v311 = vld [vmem:[%s223 + $0x50] sm:$0xf]
      %v312 = vld [vmem:[%s223 + $0x54] sm:$0xf]
      %v313 = vld [vmem:[%s223 + $0x58] sm:$0xf]
      %v314 = vld [vmem:[%s223 + $0x5c] sm:$0xf]
      %v315 = vld [vmem:[%s223 + $0x60] sm:$0xf]
      %v316 = vld [vmem:[%s223 + $0x64] sm:$0xf]
      %v317 = vld [vmem:[%s223 + $0x68] sm:$0xf]
      %v318 = vld [vmem:[%s223 + $0x6c] sm:$0xf]
      %v319 = vld [vmem:[%s223 + $0x70] sm:$0xf]
      %v320 = vld [vmem:[%s223 + $0x74] sm:$0xf]
      %v321 = vld [vmem:[%s223 + $0x78] sm:$0xf]
      %v322 = vld [vmem:[%s223 + $0x7c] sm:$0xf]
      %v323 = vld [vmem:[%s223 + $0x80] sm:$0xf]
      %v324 = vld [vmem:[%s223 + $0x84] sm:$0xf]
      %v325 = vld [vmem:[%s223 + $0x88] sm:$0xf]
      %v326 = vld [vmem:[%s223 + $0x8c] sm:$0xf]
      %v327 = vld [vmem:[%s223 + $0x90] sm:$0xf]
      %v328 = vld [vmem:[%s223 + $0x94] sm:$0xf]
      %v329 = vld [vmem:[%s223 + $0x98] sm:$0xf]
      %v330 = vld [vmem:[%s223 + $0x9c] sm:$0xf]
      %v331 = vld [vmem:[%s223 + $0xa0] sm:$0xf]
      %v332 = vld [vmem:[%s223 + $0xa4] sm:$0xf]
      %v333 = vld [vmem:[%s223 + $0xa8] sm:$0xf]
      %v334 = vld [vmem:[%s223 + $0xac] sm:$0xf]
      %v335 = vld [vmem:[%s223 + $0xb0] sm:$0xf]
      %v336 = vld [vmem:[%s223 + $0xb4] sm:$0xf]
      %v337 = vld [vmem:[%s223 + $0xb8] sm:$0xf]
      %v338 = vld [vmem:[%s223 + $0xbc] sm:$0xf]
      %v339 = vld [vmem:[%s243 + $0x10] sm:$0xff]
      %v340 = vld [vmem:[%s243 + $0x50] sm:$0xff]
      %v341 = vld [vmem:[%s243 + $0x90] sm:$0xff]
      %v342 = vld [vmem:[%s243 + $0xd0] sm:$0xff]
      %v343 = vld [vmem:[%s243 + $0x18] sm:$0xff]
      %v344 = vld [vmem:[%s243 + $0x58] sm:$0xff]
      %v345 = vld [vmem:[%s243 + $0x98] sm:$0xff]
      %v346 = vld [vmem:[%s243 + $0xd8] sm:$0xff]
      %v347 = vld [vmem:[%s243 + $0x10] sm:$0xfe]
      %v348 = vld [vmem:[%s243 + $0x30] sm:$0x1]
      %v349 = vld [vmem:[%s243 + $0x50] sm:$0xfe]
      %v350 = vld [vmem:[%s243 + $0x70] sm:$0x1]
      %v351 = vld [vmem:[%s243 + $0x90] sm:$0xfe]
      %v352 = vld [vmem:[%s243 + $0xb0] sm:$0x1]
      %v353 = vld [vmem:[%s243 + $0xd0] sm:$0xfe]
      %v354 = vld [vmem:[%s243 + $0xf0] sm:$0x1]
      %v363 = vrot.slane %v347, 1
      %v364 = vrot.slane %v348, 1
      %v365 = vsel %vm268, %v363, %v364
      %v366 = vrot.slane %v349, 1
      %v367 = vrot.slane %v350, 1
      %v368 = vsel %vm268, %v366, %v367
      %v369 = vrot.slane %v351, 1
      %v370 = vrot.slane %v352, 1
      %v371 = vsel %vm268, %v369, %v370
      %v372 = vrot.slane %v353, 1
      %v373 = vrot.slane %v354, 1
      %v374 = vsel %vm268, %v372, %v373
      %v379 = vpack.c.bf16 %v340, %v339
      %v380 = vpack.c.bf16 %v344, %v343
      %v381 = vpack.c.bf16 %v368, %v365
      %v382 = vpack.c.bf16 %v342, %v341
      %v383 = vpack.c.bf16 %v346, %v345
      %v384 = vpack.c.bf16 %v374, %v371
      %s385 = scalar_lea.vmem %s223, 192
      %v386 = vld [vmem:[%s385] sm:$0xf]
      %v387 = vld [vmem:[%s385 + $0x4] sm:$0xf]
      %v388 = vld [vmem:[%s385 + $0x8] sm:$0xf]
      %v389 = vld [vmem:[%s385 + $0xc] sm:$0xf]
      %v390 = vld [vmem:[%s385 + $0x10] sm:$0xf]
      %v391 = vld [vmem:[%s385 + $0x14] sm:$0xf]
      %v392 = vld [vmem:[%s385 + $0x18] sm:$0xf]
      %v393 = vld [vmem:[%s385 + $0x1c] sm:$0xf]
      %v394 = vld [vmem:[%s385 + $0x20] sm:$0xf]
      %v395 = vld [vmem:[%s385 + $0x24] sm:$0xf]
      %v396 = vld [vmem:[%s385 + $0x28] sm:$0xf]
      %v397 = vld [vmem:[%s385 + $0x2c] sm:$0xf]
      %v398 = vld [vmem:[%s385 + $0x30] sm:$0xf]
      %v399 = vld [vmem:[%s385 + $0x34] sm:$0xf]
      %v400 = vld [vmem:[%s385 + $0x38] sm:$0xf]
      %v401 = vld [vmem:[%s385 + $0x3c] sm:$0xf]
      %v402 = vld [vmem:[%s385 + $0x40] sm:$0xf]
      %v403 = vld [vmem:[%s385 + $0x44] sm:$0xf]
      %v404 = vld [vmem:[%s385 + $0x48] sm:$0xf]
      %v405 = vld [vmem:[%s385 + $0x4c] sm:$0xf]
      %v406 = vld [vmem:[%s385 + $0x50] sm:$0xf]
      %v407 = vld [vmem:[%s385 + $0x54] sm:$0xf]
      %v408 = vld [vmem:[%s385 + $0x58] sm:$0xf]
      %v409 = vld [vmem:[%s385 + $0x5c] sm:$0xf]
      %v410 = vld [vmem:[%s385 + $0x60] sm:$0xf]
      %v411 = vld [vmem:[%s385 + $0x64] sm:$0xf]
      %v412 = vld [vmem:[%s385 + $0x68] sm:$0xf]
      %v413 = vld [vmem:[%s385 + $0x6c] sm:$0xf]
      %v414 = vld [vmem:[%s385 + $0x70] sm:$0xf]
      %v415 = vld [vmem:[%s385 + $0x74] sm:$0xf]
      %v416 = vld [vmem:[%s385 + $0x78] sm:$0xf]
      %v417 = vld [vmem:[%s385 + $0x7c] sm:$0xf]
      %v418 = vld [vmem:[%s385 + $0x80] sm:$0xf]
      %v419 = vld [vmem:[%s385 + $0x84] sm:$0xf]
      %v420 = vld [vmem:[%s385 + $0x88] sm:$0xf]
      %v421 = vld [vmem:[%s385 + $0x8c] sm:$0xf]
      %v422 = vld [vmem:[%s385 + $0x90] sm:$0xf]
      %v423 = vld [vmem:[%s385 + $0x94] sm:$0xf]
      %v424 = vld [vmem:[%s385 + $0x98] sm:$0xf]
      %v425 = vld [vmem:[%s385 + $0x9c] sm:$0xf]
      %v426 = vld [vmem:[%s385 + $0xa0] sm:$0xf]
      %v427 = vld [vmem:[%s385 + $0xa4] sm:$0xf]
      %v428 = vld [vmem:[%s385 + $0xa8] sm:$0xf]
      %v429 = vld [vmem:[%s385 + $0xac] sm:$0xf]
      %v430 = vld [vmem:[%s385 + $0xb0] sm:$0xf]
      %v431 = vld [vmem:[%s385 + $0xb4] sm:$0xf]
      %v432 = vld [vmem:[%s385 + $0xb8] sm:$0xf]
      %v433 = vld [vmem:[%s385 + $0xbc] sm:$0xf]
      %v482 = vunpack.c.l.b16 %v386
      %v483 = vunpack.c.l.b16 %v387
      %v484 = vunpack.c.l.b16 %v388
      %v485 = vunpack.c.l.b16 %v389
      %v486 = vunpack.c.l.b16 %v390
      %v487 = vunpack.c.l.b16 %v391
      %v488 = vunpack.c.l.b16 %v392
      %v489 = vunpack.c.l.b16 %v393
      %v490 = vunpack.c.l.b16 %v394
      %v491 = vunpack.c.l.b16 %v395
      %v492 = vunpack.c.l.b16 %v396
      %v493 = vunpack.c.l.b16 %v397
      %v494 = vunpack.c.l.b16 %v398
      %v495 = vunpack.c.l.b16 %v399
      %v496 = vunpack.c.l.b16 %v400
      %v497 = vunpack.c.l.b16 %v401
      %v498 = vunpack.c.l.b16 %v402
      %v499 = vunpack.c.l.b16 %v403
      %v500 = vunpack.c.l.b16 %v404
      %v501 = vunpack.c.l.b16 %v405
      %v502 = vunpack.c.l.b16 %v406
      %v503 = vunpack.c.l.b16 %v407
      %v504 = vunpack.c.l.b16 %v408
      %v505 = vunpack.c.l.b16 %v409
      %v506 = vunpack.c.l.b16 %v410
      %v507 = vunpack.c.l.b16 %v411
      %v508 = vunpack.c.l.b16 %v412
      %v509 = vunpack.c.l.b16 %v413
      %v510 = vunpack.c.l.b16 %v414
      %v511 = vunpack.c.l.b16 %v415
      %v512 = vunpack.c.l.b16 %v416
      %v513 = vunpack.c.l.b16 %v417
      %v514 = vunpack.c.l.b16 %v418
      %v515 = vunpack.c.l.b16 %v419
      %v516 = vunpack.c.l.b16 %v420
      %v517 = vunpack.c.l.b16 %v421
      %v518 = vunpack.c.l.b16 %v422
      %v519 = vunpack.c.l.b16 %v423
      %v520 = vunpack.c.l.b16 %v424
      %v521 = vunpack.c.l.b16 %v425
      %v522 = vunpack.c.l.b16 %v426
      %v523 = vunpack.c.l.b16 %v427
      %v524 = vunpack.c.l.b16 %v428
      %v525 = vunpack.c.l.b16 %v429
      %v526 = vunpack.c.l.b16 %v430
      %v527 = vunpack.c.l.b16 %v431
      %v528 = vunpack.c.l.b16 %v432
      %v529 = vunpack.c.l.b16 %v433
      %v530 = vpack.c.b16 %v483, %v482
      %v531 = vpack.c.b16 %v485, %v484
      %v532 = vpack.c.b16 %v487, %v486
      %v533 = vpack.c.b16 %v489, %v488
      %v534 = vpack.c.b16 %v491, %v490
      %v535 = vpack.c.b16 %v493, %v492
      %v536 = vpack.c.b16 %v495, %v494
      %v537 = vpack.c.b16 %v497, %v496
      %v538 = vpack.c.b16 %v499, %v498
      %v539 = vpack.c.b16 %v501, %v500
      %v540 = vpack.c.b16 %v503, %v502
      %v541 = vpack.c.b16 %v505, %v504
      %v542 = vpack.c.b16 %v507, %v506
      %v543 = vpack.c.b16 %v509, %v508
      %v544 = vpack.c.b16 %v511, %v510
      %v545 = vpack.c.b16 %v513, %v512
      %v546 = vpack.c.b16 %v515, %v514
      %v547 = vpack.c.b16 %v517, %v516
      %v548 = vpack.c.b16 %v519, %v518
      %v549 = vpack.c.b16 %v521, %v520
      %v550 = vpack.c.b16 %v523, %v522
      %v551 = vpack.c.b16 %v525, %v524
      %v552 = vpack.c.b16 %v527, %v526
      %v553 = vpack.c.b16 %v529, %v528
      %578 = vmatpush.bf16.msra.mxu0 %v537
      %579 = vmatpush.bf16.msra.mxu0 %v536
      %580 = vmatpush.bf16.msra.mxu0 %v535
      %581 = vmatpush.bf16.msra.mxu0 %v534
      %582 = vmatpush.bf16.msra.mxu0 %v533
      %583 = vmatpush.bf16.msra.mxu0 %v532
      %584 = vmatpush.bf16.msra.mxu0 %v531
      %585 = vmatpush.bf16.msra.mxu0 %v530
      %586 = vmatmul.bf16.gmra.mxu0 %v379
      %v587 = vpop.f32.mrf.mxu0
      %v588 = vadd.f32 0.0, %v587
      %v589 = vpop.f32.mrf.mxu0
      %v590 = vadd.f32 0.0, %v589
      %591 = vmatmul.bf16.gmra.mxu0 %v382
      %v592 = vpop.f32.mrf.mxu0
      %v593 = vadd.f32 0.0, %v592
      %v594 = vpop.f32.mrf.mxu0
      %v595 = vadd.f32 0.0, %v594
      %596 = vdwg.mxu0
      %597 = vmatpush.bf16.msra.mxu0 %v545
      %598 = vmatpush.bf16.msra.mxu0 %v544
      %599 = vmatpush.bf16.msra.mxu0 %v543
      %600 = vmatpush.bf16.msra.mxu0 %v542
      %601 = vmatpush.bf16.msra.mxu0 %v541
      %602 = vmatpush.bf16.msra.mxu0 %v540
      %603 = vmatpush.bf16.msra.mxu0 %v539
      %604 = vmatpush.bf16.msra.mxu0 %v538
      %605 = vmatmul.bf16.gmra.mxu0 %v380
      %v606 = vpop.f32.mrf.mxu0
      %v607 = vadd.f32 %v588, %v606
      %v608 = vpop.f32.mrf.mxu0
      %v609 = vadd.f32 %v590, %v608
      %610 = vmatmul.bf16.gmra.mxu0 %v383
      %v611 = vpop.f32.mrf.mxu0
      %v612 = vadd.f32 %v593, %v611
      %v613 = vpop.f32.mrf.mxu0
      %v614 = vadd.f32 %v595, %v613
      %615 = vdwg.mxu0
      %616 = vmatpush.bf16.msra.mxu0 %v553
      %617 = vmatpush.bf16.msra.mxu0 %v552
      %618 = vmatpush.bf16.msra.mxu0 %v551
      %619 = vmatpush.bf16.msra.mxu0 %v550
      %620 = vmatpush.bf16.msra.mxu0 %v549
      %621 = vmatpush.bf16.msra.mxu0 %v548
      %622 = vmatpush.bf16.msra.mxu0 %v547
      %623 = vmatpush.bf16.msra.mxu0 %v546
      %624 = vmatmul.bf16.gmra.mxu0 %v381
      %v625 = vpop.f32.mrf.mxu0
      %v626 = vadd.f32 %v607, %v625
      %v627 = vpop.f32.mrf.mxu0
      %v628 = vadd.f32 %v609, %v627
      %629 = vmatmul.bf16.gmra.mxu0 %v384
      %v630 = vpop.f32.mrf.mxu0
      %v631 = vadd.f32 %v612, %v630
      %v632 = vpop.f32.mrf.mxu0
      %v633 = vadd.f32 %v614, %v632
      %634 = vdwg.mxu0
      %v683 = vunpack.c.l.b16 %v291
      %v684 = vunpack.c.l.b16 %v292
      %v685 = vunpack.c.l.b16 %v293
      %v686 = vunpack.c.l.b16 %v294
      %v687 = vunpack.c.l.b16 %v295
      %v688 = vunpack.c.l.b16 %v296
      %v689 = vunpack.c.l.b16 %v297
      %v690 = vunpack.c.l.b16 %v298
      %v691 = vunpack.c.l.b16 %v299
      %v692 = vunpack.c.l.b16 %v300
      %v693 = vunpack.c.l.b16 %v301
      %v694 = vunpack.c.l.b16 %v302
      %v695 = vunpack.c.l.b16 %v303
      %v696 = vunpack.c.l.b16 %v304
      %v697 = vunpack.c.l.b16 %v305
      %v698 = vunpack.c.l.b16 %v306
      %v699 = vunpack.c.l.b16 %v307
      %v700 = vunpack.c.l.b16 %v308
      %v701 = vunpack.c.l.b16 %v309
      %v702 = vunpack.c.l.b16 %v310
      %v703 = vunpack.c.l.b16 %v311
      %v704 = vunpack.c.l.b16 %v312
      %v705 = vunpack.c.l.b16 %v313
      %v706 = vunpack.c.l.b16 %v314
      %v707 = vunpack.c.l.b16 %v315
      %v708 = vunpack.c.l.b16 %v316
      %v709 = vunpack.c.l.b16 %v317
      %v710 = vunpack.c.l.b16 %v318
      %v711 = vunpack.c.l.b16 %v319
      %v712 = vunpack.c.l.b16 %v320
      %v713 = vunpack.c.l.b16 %v321
      %v714 = vunpack.c.l.b16 %v322
      %v715 = vunpack.c.l.b16 %v323
      %v716 = vunpack.c.l.b16 %v324
      %v717 = vunpack.c.l.b16 %v325
      %v718 = vunpack.c.l.b16 %v326
      %v719 = vunpack.c.l.b16 %v327
      %v720 = vunpack.c.l.b16 %v328
      %v721 = vunpack.c.l.b16 %v329
      %v722 = vunpack.c.l.b16 %v330
      %v723 = vunpack.c.l.b16 %v331
      %v724 = vunpack.c.l.b16 %v332
      %v725 = vunpack.c.l.b16 %v333
      %v726 = vunpack.c.l.b16 %v334
      %v727 = vunpack.c.l.b16 %v335
      %v728 = vunpack.c.l.b16 %v336
      %v729 = vunpack.c.l.b16 %v337
      %v730 = vunpack.c.l.b16 %v338
      %v731 = vpack.c.b16 %v684, %v683
      %v732 = vpack.c.b16 %v686, %v685
      %v733 = vpack.c.b16 %v688, %v687
      %v734 = vpack.c.b16 %v690, %v689
      %v735 = vpack.c.b16 %v692, %v691
      %v736 = vpack.c.b16 %v694, %v693
      %v737 = vpack.c.b16 %v696, %v695
      %v738 = vpack.c.b16 %v698, %v697
      %v739 = vpack.c.b16 %v700, %v699
      %v740 = vpack.c.b16 %v702, %v701
      %v741 = vpack.c.b16 %v704, %v703
      %v742 = vpack.c.b16 %v706, %v705
      %v743 = vpack.c.b16 %v708, %v707
      %v744 = vpack.c.b16 %v710, %v709
      %v745 = vpack.c.b16 %v712, %v711
      %v746 = vpack.c.b16 %v714, %v713
      %v747 = vpack.c.b16 %v716, %v715
      %v748 = vpack.c.b16 %v718, %v717
      %v749 = vpack.c.b16 %v720, %v719
      %v750 = vpack.c.b16 %v722, %v721
      %v751 = vpack.c.b16 %v724, %v723
      %v752 = vpack.c.b16 %v726, %v725
      %v753 = vpack.c.b16 %v728, %v727
      %v754 = vpack.c.b16 %v730, %v729
      %779 = vmatpush.bf16.msra.mxu0 %v738
      %780 = vmatpush.bf16.msra.mxu0 %v737
      %781 = vmatpush.bf16.msra.mxu0 %v736
      %782 = vmatpush.bf16.msra.mxu0 %v735
      %783 = vmatpush.bf16.msra.mxu0 %v734
      %784 = vmatpush.bf16.msra.mxu0 %v733
      %785 = vmatpush.bf16.msra.mxu0 %v732
      %786 = vmatpush.bf16.msra.mxu0 %v731
      %787 = vmatmul.bf16.gmra.mxu0 %v285
      %v788 = vpop.f32.mrf.mxu0
      %v789 = vadd.f32 %v626, %v788
      %v790 = vpop.f32.mrf.mxu0
      %v791 = vadd.f32 %v628, %v790
      %792 = vmatmul.bf16.gmra.mxu0 %v288
      %v793 = vpop.f32.mrf.mxu0
      %v794 = vadd.f32 %v631, %v793
      %v795 = vpop.f32.mrf.mxu0
      %v796 = vadd.f32 %v633, %v795
      %797 = vdwg.mxu0
      %798 = vmatpush.bf16.msra.mxu0 %v746
      %799 = vmatpush.bf16.msra.mxu0 %v745
      %800 = vmatpush.bf16.msra.mxu0 %v744
      %801 = vmatpush.bf16.msra.mxu0 %v743
      %802 = vmatpush.bf16.msra.mxu0 %v742
      %803 = vmatpush.bf16.msra.mxu0 %v741
      %804 = vmatpush.bf16.msra.mxu0 %v740
      %805 = vmatpush.bf16.msra.mxu0 %v739
      %806 = vmatmul.bf16.gmra.mxu0 %v286
      %v807 = vpop.f32.mrf.mxu0
      %v808 = vadd.f32 %v789, %v807
      %v809 = vpop.f32.mrf.mxu0
      %v810 = vadd.f32 %v791, %v809
      %811 = vmatmul.bf16.gmra.mxu0 %v289
      %v812 = vpop.f32.mrf.mxu0
      %v813 = vadd.f32 %v794, %v812
      %v814 = vpop.f32.mrf.mxu0
      %v815 = vadd.f32 %v796, %v814
      %816 = vdwg.mxu0
      %817 = vmatpush.bf16.msra.mxu0 %v754
      %818 = vmatpush.bf16.msra.mxu0 %v753
      %819 = vmatpush.bf16.msra.mxu0 %v752
      %820 = vmatpush.bf16.msra.mxu0 %v751
      %821 = vmatpush.bf16.msra.mxu0 %v750
      %822 = vmatpush.bf16.msra.mxu0 %v749
      %823 = vmatpush.bf16.msra.mxu0 %v748
      %824 = vmatpush.bf16.msra.mxu0 %v747
      %825 = vmatmul.bf16.gmra.mxu0 %v287
      %v826 = vpop.f32.mrf.mxu0
      %v827 = vadd.f32 %v808, %v826
      %v828 = vpop.f32.mrf.mxu0
      %v829 = vadd.f32 %v810, %v828
      %830 = vmatmul.bf16.gmra.mxu0 %v290
      %v831 = vpop.f32.mrf.mxu0
      %v832 = vadd.f32 %v813, %v831
      %v833 = vpop.f32.mrf.mxu0
      %v834 = vadd.f32 %v815, %v833
      %835 = vdwg.mxu0
      %s836 = sadd.s32 %s240, 1
      %s837 = smul.u32 %s836, 8
      %s838 = smul.addr %s837, 8
      %s839 = scalar_lea.vmem %s219, %s838
      %v840 = vld [vmem:[%s839] sm:$0xff]
      %v841 = vld [vmem:[%s839 + $0x40] sm:$0xff]
      %v842 = vld [vmem:[%s839 + $0x80] sm:$0xff]
      %v843 = vld [vmem:[%s839 + $0xc0] sm:$0xff]
      %v844 = vld [vmem:[%s839 + $0x8] sm:$0xff]
      %v845 = vld [vmem:[%s839 + $0x48] sm:$0xff]
      %v846 = vld [vmem:[%s839 + $0x88] sm:$0xff]
      %v847 = vld [vmem:[%s839 + $0xc8] sm:$0xff]
      %v848 = vld [vmem:[%s839] sm:$0xfe]
      %v849 = vld [vmem:[%s839 + $0x20] sm:$0x1]
      %v850 = vld [vmem:[%s839 + $0x40] sm:$0xfe]
      %v851 = vld [vmem:[%s839 + $0x60] sm:$0x1]
      %v852 = vld [vmem:[%s839 + $0x80] sm:$0xfe]
      %v853 = vld [vmem:[%s839 + $0xa0] sm:$0x1]
      %v854 = vld [vmem:[%s839 + $0xc0] sm:$0xfe]
      %v855 = vld [vmem:[%s839 + $0xe0] sm:$0x1]
      %v864 = vrot.slane %v848, 1
      %v865 = vrot.slane %v849, 1
      %v866 = vsel %vm268, %v864, %v865
      %v867 = vrot.slane %v850, 1
      %v868 = vrot.slane %v851, 1
      %v869 = vsel %vm268, %v867, %v868
      %v870 = vrot.slane %v852, 1
      %v871 = vrot.slane %v853, 1
      %v872 = vsel %vm268, %v870, %v871
      %v873 = vrot.slane %v854, 1
      %v874 = vrot.slane %v855, 1
      %v875 = vsel %vm268, %v873, %v874
      %v880 = vpack.c.bf16 %v841, %v840
      %v881 = vpack.c.bf16 %v845, %v844
      %v882 = vpack.c.bf16 %v869, %v866
      %v883 = vpack.c.bf16 %v843, %v842
      %v884 = vpack.c.bf16 %v847, %v846
      %v885 = vpack.c.bf16 %v875, %v872
      %s886 = scalar_lea.vmem %s223, 384
      %v887 = vld [vmem:[%s886] sm:$0xf]
      %v888 = vld [vmem:[%s886 + $0x4] sm:$0xf]
      %v889 = vld [vmem:[%s886 + $0x8] sm:$0xf]
      %v890 = vld [vmem:[%s886 + $0xc] sm:$0xf]
      %v891 = vld [vmem:[%s886 + $0x10] sm:$0xf]
      %v892 = vld [vmem:[%s886 + $0x14] sm:$0xf]
      %v893 = vld [vmem:[%s886 + $0x18] sm:$0xf]
      %v894 = vld [vmem:[%s886 + $0x1c] sm:$0xf]
      %v895 = vld [vmem:[%s886 + $0x20] sm:$0xf]
      %v896 = vld [vmem:[%s886 + $0x24] sm:$0xf]
      %v897 = vld [vmem:[%s886 + $0x28] sm:$0xf]
      %v898 = vld [vmem:[%s886 + $0x2c] sm:$0xf]
      %v899 = vld [vmem:[%s886 + $0x30] sm:$0xf]
      %v900 = vld [vmem:[%s886 + $0x34] sm:$0xf]
      %v901 = vld [vmem:[%s886 + $0x38] sm:$0xf]
      %v902 = vld [vmem:[%s886 + $0x3c] sm:$0xf]
      %v903 = vld [vmem:[%s886 + $0x40] sm:$0xf]
      %v904 = vld [vmem:[%s886 + $0x44] sm:$0xf]
      %v905 = vld [vmem:[%s886 + $0x48] sm:$0xf]
      %v906 = vld [vmem:[%s886 + $0x4c] sm:$0xf]
      %v907 = vld [vmem:[%s886 + $0x50] sm:$0xf]
      %v908 = vld [vmem:[%s886 + $0x54] sm:$0xf]
      %v909 = vld [vmem:[%s886 + $0x58] sm:$0xf]
      %v910 = vld [vmem:[%s886 + $0x5c] sm:$0xf]
      %v911 = vld [vmem:[%s886 + $0x60] sm:$0xf]
      %v912 = vld [vmem:[%s886 + $0x64] sm:$0xf]
      %v913 = vld [vmem:[%s886 + $0x68] sm:$0xf]
      %v914 = vld [vmem:[%s886 + $0x6c] sm:$0xf]
      %v915 = vld [vmem:[%s886 + $0x70] sm:$0xf]
      %v916 = vld [vmem:[%s886 + $0x74] sm:$0xf]
      %v917 = vld [vmem:[%s886 + $0x78] sm:$0xf]
      %v918 = vld [vmem:[%s886 + $0x7c] sm:$0xf]
      %v919 = vld [vmem:[%s886 + $0x80] sm:$0xf]
      %v920 = vld [vmem:[%s886 + $0x84] sm:$0xf]
      %v921 = vld [vmem:[%s886 + $0x88] sm:$0xf]
      %v922 = vld [vmem:[%s886 + $0x8c] sm:$0xf]
      %v923 = vld [vmem:[%s886 + $0x90] sm:$0xf]
      %v924 = vld [vmem:[%s886 + $0x94] sm:$0xf]
      %v925 = vld [vmem:[%s886 + $0x98] sm:$0xf]
      %v926 = vld [vmem:[%s886 + $0x9c] sm:$0xf]
      %v927 = vld [vmem:[%s886 + $0xa0] sm:$0xf]
      %v928 = vld [vmem:[%s886 + $0xa4] sm:$0xf]
      %v929 = vld [vmem:[%s886 + $0xa8] sm:$0xf]
      %v930 = vld [vmem:[%s886 + $0xac] sm:$0xf]
      %v931 = vld [vmem:[%s886 + $0xb0] sm:$0xf]
      %v932 = vld [vmem:[%s886 + $0xb4] sm:$0xf]
      %v933 = vld [vmem:[%s886 + $0xb8] sm:$0xf]
      %v934 = vld [vmem:[%s886 + $0xbc] sm:$0xf]
      %v983 = vunpack.c.l.b16 %v887
      %v984 = vunpack.c.l.b16 %v888
      %v985 = vunpack.c.l.b16 %v889
      %v986 = vunpack.c.l.b16 %v890
      %v987 = vunpack.c.l.b16 %v891
      %v988 = vunpack.c.l.b16 %v892
      %v989 = vunpack.c.l.b16 %v893
      %v990 = vunpack.c.l.b16 %v894
      %v991 = vunpack.c.l.b16 %v895
      %v992 = vunpack.c.l.b16 %v896
      %v993 = vunpack.c.l.b16 %v897
      %v994 = vunpack.c.l.b16 %v898
      %v995 = vunpack.c.l.b16 %v899
      %v996 = vunpack.c.l.b16 %v900
      %v997 = vunpack.c.l.b16 %v901
      %v998 = vunpack.c.l.b16 %v902
      %v999 = vunpack.c.l.b16 %v903
      %v1000 = vunpack.c.l.b16 %v904
      %v1001 = vunpack.c.l.b16 %v905
      %v1002 = vunpack.c.l.b16 %v906
      %v1003 = vunpack.c.l.b16 %v907
      %v1004 = vunpack.c.l.b16 %v908
      %v1005 = vunpack.c.l.b16 %v909
      %v1006 = vunpack.c.l.b16 %v910
      %v1007 = vunpack.c.l.b16 %v911
      %v1008 = vunpack.c.l.b16 %v912
      %v1009 = vunpack.c.l.b16 %v913
      %v1010 = vunpack.c.l.b16 %v914
      %v1011 = vunpack.c.l.b16 %v915
      %v1012 = vunpack.c.l.b16 %v916
      %v1013 = vunpack.c.l.b16 %v917
      %v1014 = vunpack.c.l.b16 %v918
      %v1015 = vunpack.c.l.b16 %v919
      %v1016 = vunpack.c.l.b16 %v920
      %v1017 = vunpack.c.l.b16 %v921
      %v1018 = vunpack.c.l.b16 %v922
      %v1019 = vunpack.c.l.b16 %v923
      %v1020 = vunpack.c.l.b16 %v924
      %v1021 = vunpack.c.l.b16 %v925
      %v1022 = vunpack.c.l.b16 %v926
      %v1023 = vunpack.c.l.b16 %v927
      %v1024 = vunpack.c.l.b16 %v928
      %v1025 = vunpack.c.l.b16 %v929
      %v1026 = vunpack.c.l.b16 %v930
      %v1027 = vunpack.c.l.b16 %v931
      %v1028 = vunpack.c.l.b16 %v932
      %v1029 = vunpack.c.l.b16 %v933
      %v1030 = vunpack.c.l.b16 %v934
      %v1031 = vpack.c.b16 %v984, %v983
      %v1032 = vpack.c.b16 %v986, %v985
      %v1033 = vpack.c.b16 %v988, %v987
      %v1034 = vpack.c.b16 %v990, %v989
      %v1035 = vpack.c.b16 %v992, %v991
      %v1036 = vpack.c.b16 %v994, %v993
      %v1037 = vpack.c.b16 %v996, %v995
      %v1038 = vpack.c.b16 %v998, %v997
      %v1039 = vpack.c.b16 %v1000, %v999
      %v1040 = vpack.c.b16 %v1002, %v1001
      %v1041 = vpack.c.b16 %v1004, %v1003
      %v1042 = vpack.c.b16 %v1006, %v1005
      %v1043 = vpack.c.b16 %v1008, %v1007
      %v1044 = vpack.c.b16 %v1010, %v1009
      %v1045 = vpack.c.b16 %v1012, %v1011
      %v1046 = vpack.c.b16 %v1014, %v1013
      %v1047 = vpack.c.b16 %v1016, %v1015
      %v1048 = vpack.c.b16 %v1018, %v1017
      %v1049 = vpack.c.b16 %v1020, %v1019
      %v1050 = vpack.c.b16 %v1022, %v1021
      %v1051 = vpack.c.b16 %v1024, %v1023
      %v1052 = vpack.c.b16 %v1026, %v1025
      %v1053 = vpack.c.b16 %v1028, %v1027
      %v1054 = vpack.c.b16 %v1030, %v1029
      %1079 = vmatpush.bf16.msra.mxu0 %v1038
      %1080 = vmatpush.bf16.msra.mxu0 %v1037
      %1081 = vmatpush.bf16.msra.mxu0 %v1036
      %1082 = vmatpush.bf16.msra.mxu0 %v1035
      %1083 = vmatpush.bf16.msra.mxu0 %v1034
      %1084 = vmatpush.bf16.msra.mxu0 %v1033
      %1085 = vmatpush.bf16.msra.mxu0 %v1032
      %1086 = vmatpush.bf16.msra.mxu0 %v1031
      %1087 = vmatmul.bf16.gmra.mxu0 %v880
      %v1088 = vpop.f32.mrf.mxu0
      %v1089 = vadd.f32 0.0, %v1088
      %v1090 = vpop.f32.mrf.mxu0
      %v1091 = vadd.f32 0.0, %v1090
      %1092 = vmatmul.bf16.gmra.mxu0 %v883
      %v1093 = vpop.f32.mrf.mxu0
      %v1094 = vadd.f32 0.0, %v1093
      %v1095 = vpop.f32.mrf.mxu0
      %v1096 = vadd.f32 0.0, %v1095
      %1097 = vdwg.mxu0
      %1098 = vmatpush.bf16.msra.mxu0 %v1046
      %1099 = vmatpush.bf16.msra.mxu0 %v1045
      %1100 = vmatpush.bf16.msra.mxu0 %v1044
      %1101 = vmatpush.bf16.msra.mxu0 %v1043
      %1102 = vmatpush.bf16.msra.mxu0 %v1042
      %1103 = vmatpush.bf16.msra.mxu0 %v1041
      %1104 = vmatpush.bf16.msra.mxu0 %v1040
      %1105 = vmatpush.bf16.msra.mxu0 %v1039
      %1106 = vmatmul.bf16.gmra.mxu0 %v881
      %v1107 = vpop.f32.mrf.mxu0
      %v1108 = vadd.f32 %v1089, %v1107
      %v1109 = vpop.f32.mrf.mxu0
      %v1110 = vadd.f32 %v1091, %v1109
      %1111 = vmatmul.bf16.gmra.mxu0 %v884
      %v1112 = vpop.f32.mrf.mxu0
      %v1113 = vadd.f32 %v1094, %v1112
      %v1114 = vpop.f32.mrf.mxu0
      %v1115 = vadd.f32 %v1096, %v1114
      %1116 = vdwg.mxu0
      %1117 = vmatpush.bf16.msra.mxu0 %v1054
      %1118 = vmatpush.bf16.msra.mxu0 %v1053
      %1119 = vmatpush.bf16.msra.mxu0 %v1052
      %1120 = vmatpush.bf16.msra.mxu0 %v1051
      %1121 = vmatpush.bf16.msra.mxu0 %v1050
      %1122 = vmatpush.bf16.msra.mxu0 %v1049
      %1123 = vmatpush.bf16.msra.mxu0 %v1048
      %1124 = vmatpush.bf16.msra.mxu0 %v1047
      %1125 = vmatmul.bf16.gmra.mxu0 %v882
      %v1126 = vpop.f32.mrf.mxu0
      %v1127 = vadd.f32 %v1108, %v1126
      %v1128 = vpop.f32.mrf.mxu0
      %v1129 = vadd.f32 %v1110, %v1128
      %1130 = vmatmul.bf16.gmra.mxu0 %v885
      %v1131 = vpop.f32.mrf.mxu0
      %v1132 = vadd.f32 %v1113, %v1131
      %v1133 = vpop.f32.mrf.mxu0
      %v1134 = vadd.f32 %v1115, %v1133
      %1135 = vdwg.mxu0
      %v1136 = vadd.f32 %v827, %v1127
      %v1137 = vadd.f32 %v829, %v1129
      %v1138 = vadd.f32 %v832, %v1132
      %v1139 = vadd.f32 %v834, %v1134
      %v1140 = vld [vmem:[%s226] sm:$0x1]
      %v1142 = vperm.slane %v1140, 0
      %v1144 = vadd.f32 %v1136, %v1142
      %v1145 = vadd.f32 %v1137, %v1142
      %v1146 = vadd.f32 %v1138, %v1142
      %v1147 = vadd.f32 %v1139, %v1142
      %v1148 = vmax.f32 %v1144, 0.0
      %v1149 = vmax.f32 %v1145, 0.0
      %v1150 = vmax.f32 %v1146, 0.0
      %v1151 = vmax.f32 %v1147, 0.0
      %v1152 = vpack.c.bf16 %v1148, %v1148
      %v1153 = vpack.c.bf16 %v1149, %v1149
      %v1154 = vpack.c.bf16 %v1150, %v1150
      %v1155 = vpack.c.bf16 %v1151, %v1151
      %1156 = vst [vmem:[%s238] sm:$0xf] %v1152
      %1157 = vst [vmem:[%s238 + $0x4] sm:$0xf] %v1153
      %1158 = vst [vmem:[%s238 + $0x8] sm:$0xf] %v1154
      %1159 = vst [vmem:[%s238 + $0xc] sm:$0xf] %v1155
      %s1160 = smul.u32 4, %s20
      %p1161 = scmp.lt.s32.totalorder %s19, 1
      %s1162 = scalar_select %p1161, %s19, 1
      %p1163 = scmp.lt.s32.totalorder %s1160, 3
      %s1164 = scalar_select %p1163, %s1160, 3
      %p1165 = scmp.lt.s32.totalorder %s21, 0
      %s1166 = scalar_select %p1165, %s21, 0
      %s1167 = sadd.s32 %s1166, %s1164
      %s1168 = smul.addr %s1162, 4
      %s1169 = sadd.s32 %s1167, %s1168
      %s1170 = smul.addr %s1169, 4
      %s1171 = scalar_lea.vmem %s3, %s1170
      // Predicated region
      $region33: #{block_forward.5} parent=31 // pred_check
        %p1172 = pneg %p133
      $region34: #{block_forward.5} parent=31 // pred_check_branch
        %1174 = sbr.rel (%p1172) target = $region36
      $region35: #{block_forward.5} parent=31 // pred_region
        %s1175 = smul.u32 4, %s20
      $region36: #{block_forward.5} parent=31 // pred_fallthru
        _
    $region32: #{block_forward.5} parent=5 // pred_fallthru
      _
    %p1176 = scmp.le.s32.totalorder 2, %s9
    // Predicated region
    $region37: #{block_forward.5} parent=5 // pred_check
      %p1177 = pneg %p1176
    $region38: #{block_forward.5} parent=5 // pred_check_branch
      %1179 = sbr.rel (%p1177) target = $region40
    $region39: #{block_forward.5} parent=5 // pred_region
      %s1180 = ssub.s32 %s9, 2
      // Predicated region
      $region41: #{block_forward.5} parent=39 // pred_check
        %p1181 = pneg %p139
      $region42: #{block_forward.5} parent=39 // pred_check_branch
        %1183 = sbr.rel (%p1181) target = $region44
      $region43: #{block_forward.5} parent=39 // pred_region
        %s1184 = smul.u32 4, %s23
        %p1185 = scmp.lt.s32.totalorder %s22, 1
        %s1186 = scalar_select %p1185, %s22, 1
        %p1187 = scmp.lt.s32.totalorder %s1184, 3
        %s1188 = scalar_select %p1187, %s1184, 3
        %p1189 = scmp.lt.s32.totalorder %s24, 0
        %s1190 = scalar_select %p1189, %s24, 0
        %s1191 = sadd.s32 %s1190, %s1188
        %s1192 = smul.addr %s1186, 4
        %s1193 = sadd.s32 %s1191, %s1192
        %s1194 = smul.addr %s1193, 4
        %s1195 = scalar_lea.vmem %s3, %s1194
      $region44: #{block_forward.5} parent=39 // pred_fallthru
        _
    $region40: #{block_forward.5} parent=5 // pred_fallthru
      _
  $region6: #{block_forward.5} parent=0 // loop_footer
    %s13 = sadd.s32 1, %s9
  $region7: #{block_forward.5} parent=0 // loop_footer_branch
    %8 = sbr.rel target = $region3
  $region8: #{block_forward.5} parent=0 // loop_exit
    _

// kernel: block_forward.7
$region0: #{block_forward.7}
  #allocation0 [shape = 'u32[]', space=smem, size = 0x4, offset = 0x4, fixed_abs, tag = 'smem constant byte address 0x4 - core index']
  #allocation1 [shape = 'u32[72,128]{1,0:T(1,128)}', space=vmem, size = 0x9000, scoped, tag = 'internal scratch']
  #allocation2 [shape = 'f32[32,128]{1,0:T(8,128)}', space=vmem, size = 0x4000, scoped, tag = 'scratch operand']
  %s0 = inlined_call_operand.vmem [shape: bf16[32,128], index: 0, kind: input, shape index: {}]
  %s1 = inlined_call_operand.vmem [shape: bf16[128,128], index: 1, kind: input, shape index: {}]
  %s2 = inlined_call_operand.vmem [shape: f32[1,128], index: 2, kind: input, shape index: {}]
  %s3 = inlined_call_operand.vmem [shape: bf16[32,128], index: 3, kind: input, shape index: {}]
  %s4 = inlined_call_operand.vmem [shape: f32[32,128], index: 4, kind: output, shape index: {}]
  %s5 = sld [smem:[#allocation0]]
  $region34: #{block_forward.7} parent=0
    _
  %s7 = ssub.s32 1, %s5
  %s8 = scalar_select 0, %s7, %s5
  // Predicated region
  $region2: #{block_forward.7} parent=0 // pred_check
    _
  $region3: #{block_forward.7} parent=0 // pred_check_branch
    %10 = sbr.rel (0) target = $region5
  $region4: #{block_forward.7} parent=0 // pred_region
    _
  $region5: #{block_forward.7} parent=0 // pred_fallthru
    _
  // Predicated region
  $region6: #{block_forward.7} parent=0 // pred_check
    _
  $region7: #{block_forward.7} parent=0 // pred_check_branch
    %12 = sbr.rel (0) target = $region9
  $region8: #{block_forward.7} parent=0 // pred_region
    _
  $region9: #{block_forward.7} parent=0 // pred_fallthru
    _
  // Predicated region
  $region10: #{block_forward.7} parent=0 // pred_check
    _
  $region11: #{block_forward.7} parent=0 // pred_check_branch
    %14 = sbr.rel (0) target = $region13
  $region12: #{block_forward.7} parent=0 // pred_region
    _
  $region13: #{block_forward.7} parent=0 // pred_fallthru
    _
  // Predicated region
  $region14: #{block_forward.7} parent=0 // pred_check
    _
  $region15: #{block_forward.7} parent=0 // pred_check_branch
    %16 = sbr.rel (0) target = $region17
  $region16: #{block_forward.7} parent=0 // pred_region
    _
  $region17: #{block_forward.7} parent=0 // pred_fallthru
    _
  %p17 = scmp.eq.s32.totalorder 0, 0
  // Predicated region
  $region18: #{block_forward.7} parent=0 // pred_check
    %p18 = pneg %p17
  $region19: #{block_forward.7} parent=0 // pred_check_branch
    %20 = sbr.rel (%p18) target = $region21
  $region20: #{block_forward.7} parent=0 // pred_region
    %21 = vst [vmem:[#allocation2] sm:$0xff] 0.0
    %22 = vst [vmem:[#allocation2 + $0x8] sm:$0xff] 0.0
    %23 = vst [vmem:[#allocation2 + $0x10] sm:$0xff] 0.0
    %24 = vst [vmem:[#allocation2 + $0x18] sm:$0xff] 0.0
  $region21: #{block_forward.7} parent=0 // pred_fallthru
    _
  %v25 = vld [vmem:[#allocation2] sm:$0xff]
  %v26 = vld [vmem:[#allocation2 + $0x8] sm:$0xff]
  %v27 = vld [vmem:[#allocation2 + $0x10] sm:$0xff]
  %v28 = vld [vmem:[#allocation2 + $0x18] sm:$0xff]
  %v29 = vld [vmem:[%s0] sm:$0xf]
  %v30 = vld [vmem:[%s0 + $0x4] sm:$0xf]
  %v31 = vld [vmem:[%s0 + $0x8] sm:$0xf]
  %v32 = vld [vmem:[%s0 + $0xc] sm:$0xf]
  %v33 = vld [vmem:[%s1] sm:$0xf]
  %v34 = vld [vmem:[%s1 + $0x4] sm:$0xf]
  %v35 = vld [vmem:[%s1 + $0x8] sm:$0xf]
  %v36 = vld [vmem:[%s1 + $0xc] sm:$0xf]
  %v37 = vld [vmem:[%s1 + $0x10] sm:$0xf]
  %v38 = vld [vmem:[%s1 + $0x14] sm:$0xf]
  %v39 = vld [vmem:[%s1 + $0x18] sm:$0xf]
  %v40 = vld [vmem:[%s1 + $0x1c] sm:$0xf]
  %v41 = vld [vmem:[%s1 + $0x20] sm:$0xf]
  %v42 = vld [vmem:[%s1 + $0x24] sm:$0xf]
  %v43 = vld [vmem:[%s1 + $0x28] sm:$0xf]
  %v44 = vld [vmem:[%s1 + $0x2c] sm:$0xf]
  %v45 = vld [vmem:[%s1 + $0x30] sm:$0xf]
  %v46 = vld [vmem:[%s1 + $0x34] sm:$0xf]
  %v47 = vld [vmem:[%s1 + $0x38] sm:$0xf]
  %v48 = vld [vmem:[%s1 + $0x3c] sm:$0xf]
  %v53 = vunpack.c.l.b16 %v29
  %v54 = vunpack.c.l.b16 %v30
  %v55 = vunpack.c.l.b16 %v31
  %v56 = vunpack.c.l.b16 %v32
  %v57 = vpack.c.b16 %v54, %v53
  %v58 = vpack.c.b16 %v56, %v55
  %v77 = vunpack.c.l.b16 %v33
  %v78 = vunpack.c.l.b16 %v34
  %v79 = vunpack.c.l.b16 %v35
  %v80 = vunpack.c.l.b16 %v36
  %v81 = vunpack.c.l.b16 %v37
  %v82 = vunpack.c.l.b16 %v38
  %v83 = vunpack.c.l.b16 %v39
  %v84 = vunpack.c.l.b16 %v40
  %v85 = vunpack.c.l.b16 %v41
  %v86 = vunpack.c.l.b16 %v42
  %v87 = vunpack.c.l.b16 %v43
  %v88 = vunpack.c.l.b16 %v44
  %v89 = vunpack.c.l.b16 %v45
  %v90 = vunpack.c.l.b16 %v46
  %v91 = vunpack.c.l.b16 %v47
  %v92 = vunpack.c.l.b16 %v48
  %v93 = vpack.c.b16 %v78, %v77
  %v94 = vpack.c.b16 %v80, %v79
  %v95 = vpack.c.b16 %v82, %v81
  %v96 = vpack.c.b16 %v84, %v83
  %v97 = vpack.c.b16 %v86, %v85
  %v98 = vpack.c.b16 %v88, %v87
  %v99 = vpack.c.b16 %v90, %v89
  %v100 = vpack.c.b16 %v92, %v91
  %109 = vmatpush.bf16.msra.mxu0 %v100
  %110 = vmatpush.bf16.msra.mxu0 %v99
  %111 = vmatpush.bf16.msra.mxu0 %v98
  %112 = vmatpush.bf16.msra.mxu0 %v97
  %113 = vmatpush.bf16.msra.mxu0 %v96
  %114 = vmatpush.bf16.msra.mxu0 %v95
  %115 = vmatpush.bf16.msra.mxu0 %v94
  %116 = vmatpush.bf16.msra.mxu0 %v93
  %117 = vmatmul.bf16.gmra.mxu0 %v57
  %v118 = vpop.f32.mrf.mxu0
  %v119 = vadd.f32 0.0, %v118
  %v120 = vpop.f32.mrf.mxu0
  %v121 = vadd.f32 0.0, %v120
  %122 = vmatmul.bf16.gmra.mxu0 %v58
  %v123 = vpop.f32.mrf.mxu0
  %v124 = vadd.f32 0.0, %v123
  %v125 = vpop.f32.mrf.mxu0
  %v126 = vadd.f32 0.0, %v125
  %127 = vdwg.mxu0
  %v128 = vadd.f32 %v25, %v119
  %v129 = vadd.f32 %v26, %v121
  %v130 = vadd.f32 %v27, %v124
  %v131 = vadd.f32 %v28, %v126
  %132 = vst [vmem:[#allocation2] sm:$0xff] %v128
  %133 = vst [vmem:[#allocation2 + $0x8] sm:$0xff] %v129
  %134 = vst [vmem:[#allocation2 + $0x10] sm:$0xff] %v130
  %135 = vst [vmem:[#allocation2 + $0x18] sm:$0xff] %v131
  // Predicated region
  $region22: #{block_forward.7} parent=0 // pred_check
    %p136 = pneg %p17
  $region23: #{block_forward.7} parent=0 // pred_check_branch
    %138 = sbr.rel (%p136) target = $region25
  $region24: #{block_forward.7} parent=0 // pred_region
    %v139 = vld [vmem:[#allocation2] sm:$0xff]
    %v140 = vld [vmem:[#allocation2 + $0x8] sm:$0xff]
    %v141 = vld [vmem:[#allocation2 + $0x10] sm:$0xff]
    %v142 = vld [vmem:[#allocation2 + $0x18] sm:$0xff]
    %v143 = vld [vmem:[%s2] sm:$0x1]
    %v145 = vperm.slane %v143, 0
    %v147 = vadd.f32 %v139, %v145
    %v148 = vadd.f32 %v140, %v145
    %v149 = vadd.f32 %v141, %v145
    %v150 = vadd.f32 %v142, %v145
    %v151 = vld [vmem:[%s3] sm:$0xf]
    %v152 = vld [vmem:[%s3 + $0x4] sm:$0xf]
    %v153 = vld [vmem:[%s3 + $0x8] sm:$0xf]
    %v154 = vld [vmem:[%s3 + $0xc] sm:$0xf]
    %v155 = vunpack.c.l.bf16 %v151
    %v156 = vunpack.c.l.bf16 %v152
    %v157 = vunpack.c.l.bf16 %v153
    %v158 = vunpack.c.l.bf16 %v154
    %v159 = vadd.f32 %v147, %v155
    %v160 = vadd.f32 %v148, %v156
    %v161 = vadd.f32 %v149, %v157
    %v162 = vadd.f32 %v150, %v158
    %v163 = vmax.f32 %v159, 0.0
    %v164 = vmax.f32 %v160, 0.0
    %v165 = vmax.f32 %v161, 0.0
    %v166 = vmax.f32 %v162, 0.0
    %167 = vst [vmem:[%s4] sm:$0xff] %v163
    %168 = vst [vmem:[%s4 + $0x8] sm:$0xff] %v164
    %169 = vst [vmem:[%s4 + $0x10] sm:$0xff] %v165
    %170 = vst [vmem:[%s4 + $0x18] sm:$0xff] %v166
  $region25: #{block_forward.7} parent=0 // pred_fallthru
    _
  // Predicated region
  $region26: #{block_forward.7} parent=0 // pred_check
    _
  $region27: #{block_forward.7} parent=0 // pred_check_branch
    %172 = sbr.rel (0) target = $region29
  $region28: #{block_forward.7} parent=0 // pred_region
    _
  $region29: #{block_forward.7} parent=0 // pred_fallthru
    _
  // Predicated region
  $region30: #{block_forward.7} parent=0 // pred_check
    _
  $region31: #{block_forward.7} parent=0 // pred_check_branch
    %174 = sbr.rel (0) target = $region33
  $region32: #{block_forward.7} parent=0 // pred_region
    _
  $region33: #{block_forward.7} parent=0 // pred_fallthru
    _

</llo_original>
